<compile_context>
chip_gen: v7x
topology: tpu7x:2x2x1
jax: 0.10.0
libtpu: 0.0.40
codegen_flags: <defaults>
</compile_context>

<pallas_src>
import functools

import jax
import jax.numpy as jnp
from jax import lax
from jax.experimental import pallas as pl
from jax.experimental.pallas import tpu as pltpu

LANE = 128
_EPS = 1e-5


def _round_up(x, m):
    return ((x + m - 1) // m) * m


@functools.lru_cache(maxsize=1)
def _chip_info():
    """Returns (mxu_is_256, vmem_limit_bytes) for the local TPU generation."""
    kind = ""
    try:
        kind = jax.devices()[0].device_kind.lower()
    except Exception:
        pass
    mxu_256 = any(tag in kind for tag in ("v6", "v7", "7x"))
    try:
        cap = int(pltpu.get_tpu_info().vmem_capacity_bytes)
    except Exception:
        cap = 64 * 1024 * 1024
    # Leave headroom for compiler scratch/spills: 3/4 of physical, capped at 96 MiB
    # (v7x: 64 MiB -> 48 MiB; v5e/v6e: 128 MiB -> 96 MiB).
    vmem_limit = int(min(cap * 3 // 4, 96 * 1024 * 1024))
    return mxu_256, vmem_limit


# ----------------------------------------------------------------------------
# Pallas kernel 1: conv-as-matmul (K = 9*Cin) + per-tile channel sum / sumsq
# ----------------------------------------------------------------------------
def _conv_stats_kernel(x_ref, w_ref, y_ref, stats_ref):
    # x_ref     : (TM, Kp)    bf16  im2col rows for this tile
    # w_ref     : (Kp, Cp)    bf16  reshaped 3x3 weights (same block every step)
    # y_ref     : (TM, Cp)    bf16  raw conv output (pre-BN)
    # stats_ref : (1, 2, Cp)  f32   row 0 = sum, row 1 = sum of squares
    acc = jnp.dot(x_ref[...], w_ref[...], preferred_element_type=jnp.float32)
    y_ref[...] = acc.astype(y_ref.dtype)

    # No conv bias and zero-padded im2col rows => rows past M contribute exact zeros,
    # so no row-validity mask is needed for the batch statistics.
    s = jnp.sum(acc, axis=0, keepdims=True)          # (1, Cp)
    s2 = jnp.sum(acc * acc, axis=0, keepdims=True)   # (1, Cp)
    stats_ref[...] = jnp.concatenate([s, s2], axis=0)[None]   # (1, 2, Cp)


# ----------------------------------------------------------------------------
# Pallas kernel 2: folded BatchNorm (scale/shift) + ReLU, elementwise
# ----------------------------------------------------------------------------
def _bn_relu_kernel(y_ref, scale_ref, shift_ref, o_ref):
    y = y_ref[...].astype(jnp.float32)
    o_ref[...] = jnp.maximum(y * scale_ref[...] + shift_ref[...], 0.0).astype(o_ref.dtype)


# ----------------------------------------------------------------------------
# Wrapper: Conv3x3(pad=1) + BatchNorm(batch stats) + ReLU via two tiled kernels
# ----------------------------------------------------------------------------
def _im2col_3x3(x_nhwc):
    """(N,H,W,C) -> (N*H*W, 9*C) 'same' 3x3 patches of the zero-padded input."""
    N, H, W, C = x_nhwc.shape
    xp = jnp.pad(x_nhwc, ((0, 0), (1, 1), (1, 1), (0, 0)))
    cols = [xp[:, dy:dy + H, dx:dx + W, :] for dy in range(3) for dx in range(3)]
    return jnp.concatenate(cols, axis=-1).reshape(N * H * W, 9 * C)


def conv3x3_bn_relu(x_nhwc, w_hwio, gamma, beta, eps=_EPS):
    """x_nhwc: (N,H,W,Cin) f32 or bf16. Returns (N,H,W,Cout) bf16."""
    N, H, W, Cin = x_nhwc.shape
    Cout = w_hwio.shape[-1]
    M, K = N * H * W, 9 * Cin

    mxu_256, vmem_limit = _chip_info()
    c_align = 256 if mxu_256 else LANE

    # K: keep the im2col slab lean (it is the dominant HBM traffic); full-dim blocks are
    #    legal at any width, so only round up to the 128-lane boundary when K >= 128.
    Kp = K if K < LANE else _round_up(K, LANE)
    # Cout: narrow heads (<128) keep their true width (masked stores beat 16x DMA
    #       inflation); realistic widths are padded lane/MXU-dense (256 on v6e/v7x).
    Cp = Cout if Cout < LANE else _round_up(Cout, c_align)

    # v5e (128x128 MXU, single vst slot): smaller pass-1 tile when the output tile is wide.
    tm_default = 128 if (not mxu_256 and Cp >= LANE) else 256
    TM = min(tm_default, _round_up(M, 32))
    Mp = _round_up(M, TM)
    n_tiles = Mp // TM

    # Pass 2 is pure elementwise & mem-bound -> much larger row blocks (>= 0.5 MiB).
    TM2 = TM
    while TM2 * 2 <= 2048 and Mp % (TM2 * 2) == 0:
        TM2 *= 2
    n_tiles2 = Mp // TM2

    # bf16 BEFORE pad/im2col halves the wrapper-side HBM traffic of the gather.
    x_bf16 = x_nhwc.astype(jnp.bfloat16)
    xcol = jnp.pad(_im2col_3x3(x_bf16), ((0, Mp - M), (0, Kp - K)))
    w2d = jnp.pad(w_hwio.reshape(K, Cout).astype(jnp.bfloat16),
                  ((0, Kp - K), (0, Cp - Cout)))
    gamma_p = jnp.pad(gamma.astype(jnp.float32), (0, Cp - Cout))  # padded channels -> scale 0
    beta_p = jnp.pad(beta.astype(jnp.float32), (0, Cp - Cout))

    cparams = pltpu.CompilerParams(dimension_semantics=("parallel",),
                                   vmem_limit_bytes=vmem_limit)

    # Pass 1: conv matmul + per-tile channel sum / sumsq.
    y_raw, stats = pl.pallas_call(
        _conv_stats_kernel,
        out_shape=(jax.ShapeDtypeStruct((Mp, Cp), jnp.bfloat16),
                   jax.ShapeDtypeStruct((n_tiles, 2, Cp), jnp.float32)),
        grid=(n_tiles,),
        in_specs=[
            pl.BlockSpec((TM, Kp), lambda i: (i, 0)),
            pl.BlockSpec((Kp, Cp), lambda i: (0, 0)),
        ],
        out_specs=(
            pl.BlockSpec((TM, Cp), lambda i: (i, 0)),
            pl.BlockSpec((1, 2, Cp), lambda i: (i, 0, 0)),
        ),
        compiler_params=cparams,
    )(xcol, w2d)

    # Finalize global BatchNorm statistics (training mode: batch stats, biased variance)
    # and fold them into a per-channel scale/shift.
    total = jnp.sum(stats, axis=0)                     # (2, Cp)
    mean = total[0] / M
    var = jnp.maximum(total[1] / M - mean * mean, 0.0)
    scale = gamma_p * lax.rsqrt(var + eps)
    shift = beta_p - mean * scale

    # Pass 2: normalize + ReLU (elementwise, fully parallel, in-place over y_raw).
    y = pl.pallas_call(
        _bn_relu_kernel,
        out_shape=jax.ShapeDtypeStruct((Mp, Cp), jnp.bfloat16),
        grid=(n_tiles2,),
        in_specs=[
            pl.BlockSpec((TM2, Cp), lambda i: (i, 0)),
            pl.BlockSpec((1, Cp), lambda i: (0, 0)),
            pl.BlockSpec((1, Cp), lambda i: (0, 0)),
        ],
        out_specs=pl.BlockSpec((TM2, Cp), lambda i: (i, 0)),
        input_output_aliases={0: 0},
        compiler_params=cparams,
    )(y_raw, scale.reshape(1, Cp), shift.reshape(1, Cp))

    return y[:M, :Cout].reshape(N, H, W, Cout)


# ----------------------------------------------------------------------------
# Plain-JAX glue: bilinear x2 upsample (align_corners=True), NHWC
# ----------------------------------------------------------------------------
def bilinear_upsample_x2_nhwc(x):
    N, H, W, C = x.shape
    Ho, Wo = 2 * H, 2 * W

    def lin_idx(n_in, n_out):
        pos = jnp.arange(n_out, dtype=jnp.float32) * (n_in - 1) / (n_out - 1)
        lo = jnp.clip(jnp.floor(pos).astype(jnp.int32), 0, n_in - 2)
        frac = pos - lo.astype(jnp.float32)
        return lo, frac

    hlo, hf = lin_idx(H, Ho)
    wlo, wf = lin_idx(W, Wo)

    x_h0 = jnp.take(x, hlo, axis=1)
    x_h1 = jnp.take(x, hlo + 1, axis=1)
    xh = x_h0 * (1.0 - hf)[None, :, None, None] + x_h1 * hf[None, :, None, None]

    x_w0 = jnp.take(xh, wlo, axis=2)
    x_w1 = jnp.take(xh, wlo + 1, axis=2)
    return x_w0 * (1.0 - wf)[None, None, :, None] + x_w1 * wf[None, None, :, None]


# ----------------------------------------------------------------------------
# Parameters (deterministic, synthetic) and UpBlock forward
# ----------------------------------------------------------------------------
def init_upblock_params(key, in_channels, out_channels):
    k1, k2, k3, k4 = jax.random.split(key, 4)
    s1 = 1.0 / jnp.sqrt(9.0 * in_channels)
    s2 = 1.0 / jnp.sqrt(9.0 * out_channels)
    return {
        # b1/b2 exist to mirror nn.Conv2d(bias=True) but are only used by the reference:
        # conv bias followed by BatchNorm on batch statistics is a mathematical no-op.
        "w1": jax.random.normal(k1, (3, 3, in_channels, out_channels), jnp.float32) * s1,
        "b1": jax.random.normal(k2, (out_channels,), jnp.float32) * s1,
        "gamma1": jnp.ones((out_channels,), jnp.float32),
        "beta1": jnp.zeros((out_channels,), jnp.float32),
        "w2": jax.random.normal(k3, (3, 3, out_channels, out_channels), jnp.float32) * s2,
        "b2": jax.random.normal(k4, (out_channels,), jnp.float32) * s2,
        "gamma2": jnp.ones((out_channels,), jnp.float32),
        "beta2": jnp.zeros((out_channels,), jnp.float32),
    }


def up_block_forward(down_input_nchw, skip_input_nchw, params):
    # NCHW -> NHWC
    down = jnp.transpose(down_input_nchw, (0, 2, 3, 1))
    skip = jnp.transpose(skip_input_nchw, (0, 2, 3, 1))

    x = bilinear_upsample_x2_nhwc(down)       # nn.Upsample(scale=2, bilinear, align_corners=True)
    x = jnp.concatenate([x, skip], axis=-1)   # torch.cat([x, skip], dim=1)
    x = x.astype(jnp.bfloat16)                # cast once, before pad/im2col

    x = conv3x3_bn_relu(x, params["w1"], params["gamma1"], params["beta1"])
    x = conv3x3_bn_relu(x, params["w2"], params["gamma2"], params["beta2"])

    # NHWC -> NCHW, back to f32 (PyTorch module returns float32)
    return jnp.transpose(x, (0, 3, 1, 2)).astype(jnp.float32)


# ----------------------------------------------------------------------------
# Pure-JAX reference (true module semantics incl. conv bias, bf16 matmul precision)
# ----------------------------------------------------------------------------
def _ref_conv_bn_relu(x_nhwc, w, b, gamma, beta, eps=_EPS):
    y = lax.conv_general_dilated(
        x_nhwc.astype(jnp.bfloat16), w.astype(jnp.bfloat16), (1, 1), "SAME",
        dimension_numbers=("NHWC", "HWIO", "NHWC"),
        preferred_element_type=jnp.float32) + b
    mean = y.mean(axis=(0, 1, 2))
    var = ((y - mean) ** 2).mean(axis=(0, 1, 2))
    y = (y - mean) * lax.rsqrt(var + eps) * gamma + beta
    return jnp.maximum(y, 0.0).astype(jnp.bfloat16)


def _ref_up_block(down_input_nchw, skip_input_nchw, params):
    down = jnp.transpose(down_input_nchw, (0, 2, 3, 1))
    skip = jnp.transpose(skip_input_nchw, (0, 2, 3, 1))
    x = bilinear_upsample_x2_nhwc(down)
    x = jnp.concatenate([x, skip], axis=-1).astype(jnp.bfloat16)
    x = _ref_conv_bn_relu(x, params["w1"], params["b1"], params["gamma1"], params["beta1"])
    x = _ref_conv_bn_relu(x, params["w2"], params["b2"], params["gamma2"], params["beta2"])
    return jnp.transpose(x, (0, 3, 1, 2)).astype(jnp.float32)


if __name__ == "__main__":
    key = jax.random.PRNGKey(0)
    k_down, k_skip, k_params = jax.random.split(key, 3)

    # down_input: (2, 4, 8, 8); skip_input: (2, 4, 16, 16) -> in_channels=8, out_channels=8
    N, C_down, C_skip = 2, 4, 4
    Hd, Wd = 8, 8
    out_channels = 8

    down_input = jax.random.normal(k_down, (N, C_down, Hd, Wd), jnp.float32)
    skip_input = jax.random.normal(k_skip, (N, C_skip, 2 * Hd, 2 * Wd), jnp.float32)
    params = init_upblock_params(k_params, in_channels=C_down + C_skip,
                                 out_channels=out_channels)

    fwd = jax.jit(up_block_forward)
    out = jax.block_until_ready(fwd(down_input, skip_input, params))

    assert out.shape == (N, out_channels, 2 * Hd, 2 * Wd), out.shape
    assert bool(jnp.all(jnp.isfinite(out)))

    ref = jax.block_until_ready(_ref_up_block(down_input, skip_input, params))
    assert bool(jnp.allclose(out, ref, rtol=2e-2, atol=2e-2)), "mismatch vs JAX reference"

    print("KERNEL_OK")
</pallas_src>

<mosaic_0001>
module attributes {stable_mosaic.version = 11 : i64} {
  func.func @_conv_stats_kernel(%arg0: i32, %arg1: memref<256x72xbf16, #tpu.memory_space<vmem>>, %arg2: memref<72x8xbf16, #tpu.memory_space<vmem>>, %arg3: memref<256x8xbf16, #tpu.memory_space<vmem>>, %arg4: memref<1x2x8xf32, #tpu.memory_space<vmem>>) attributes {dimension_semantics = [#tpu.dimension_semantics<parallel>], iteration_bounds = array<i64: 2>, scalar_prefetch = 0 : i64, scratch_operands = 0 : i64, tpu.core_type = #tpu.core_type<tc>, window_params = [{transform_indices = @transform_0, window_bounds = array<i64: 256, 72>}, {pipeline_mode = #tpu.pipeline_mode<synchronous>, transform_indices = @transform_1, window_bounds = array<i64: 72, 8>}, {transform_indices = @transform_2, window_bounds = array<i64: 256, 8>}, {transform_indices = @transform_3, window_bounds = array<i64: 1, 2, 8>}]} {
    %c0 = arith.constant 0 : index
    %c0_0 = arith.constant 0 : index
    %0 = vector.load %arg1[%c0, %c0_0] : memref<256x72xbf16, #tpu.memory_space<vmem>>, vector<256x72xbf16>
    %c0_1 = arith.constant 0 : index
    %c0_2 = arith.constant 0 : index
    %1 = vector.load %arg2[%c0_1, %c0_2] : memref<72x8xbf16, #tpu.memory_space<vmem>>, vector<72x8xbf16>
    %cst = arith.constant dense<0.000000e+00> : vector<256x8xf32>
    %2 = tpu.matmul %0, %1, %cst {dimension_numbers = #tpu.dot_dimension_numbers<[1], [0], [0], [1], [0, 0, 1, 1], [], []>} : vector<256x72xbf16>, vector<72x8xbf16>, vector<256x8xf32> -> vector<256x8xf32>
    %3 = arith.truncf %2 : vector<256x8xf32> to vector<256x8xbf16>
    %c0_3 = arith.constant 0 : index
    %c0_4 = arith.constant 0 : index
    %4 = vector.load %arg3[%c0_3, %c0_4] : memref<256x8xbf16, #tpu.memory_space<vmem>>, vector<256x8xbf16>
    tpu.vector_store %arg3[%c0_3, %c0_4], %3 {strides = array<i32>} : memref<256x8xbf16, #tpu.memory_space<vmem>>, vector<256x8xbf16>,
    %cst_5 = arith.constant dense<0.000000e+00> : vector<8xf32>
    %5 = vector.multi_reduction <add>, %2, %cst_5 [0] : vector<256x8xf32> to vector<8xf32>
    %6 = vector.shape_cast %5 : vector<8xf32> to vector<1x8xf32>
    %7 = arith.mulf %2, %2 : vector<256x8xf32>
    %cst_6 = arith.constant dense<0.000000e+00> : vector<8xf32>
    %8 = vector.multi_reduction <add>, %7, %cst_6 [0] : vector<256x8xf32> to vector<8xf32>
    %9 = vector.shape_cast %8 : vector<8xf32> to vector<1x8xf32>
    %10 = tpu.concatenate %6, %9 in 0 : vector<1x8xf32>, vector<1x8xf32> -> vector<2x8xf32>
    %11 = vector.shape_cast %10 : vector<2x8xf32> to vector<1x2x8xf32>
    %c0_7 = arith.constant 0 : index
    %c0_8 = arith.constant 0 : index
    %c0_9 = arith.constant 0 : index
    %12 = vector.load %arg4[%c0_7, %c0_8, %c0_9] : memref<1x2x8xf32, #tpu.memory_space<vmem>>, vector<1x2x8xf32>
    tpu.vector_store %arg4[%c0_7, %c0_8, %c0_9], %11 {strides = array<i32>} : memref<1x2x8xf32, #tpu.memory_space<vmem>>, vector<1x2x8xf32>,
    return
  }
  func.func @transform_0(%arg0: i32) -> (i32, i32) {
    %c0_i32 = arith.constant 0 : i32
    %c0_i32_0 = arith.constant 0 : i32
    return %arg0, %c0_i32 : i32, i32
  }
  func.func @transform_1(%arg0: i32) -> (i32, i32) {
    %c0_i32 = arith.constant 0 : i32
    %c0_i32_0 = arith.constant 0 : i32
    %c0_i32_1 = arith.constant 0 : i32
    return %c0_i32, %c0_i32_0 : i32, i32
  }
  func.func @transform_2(%arg0: i32) -> (i32, i32) {
    %c0_i32 = arith.constant 0 : i32
    %c0_i32_0 = arith.constant 0 : i32
    return %arg0, %c0_i32 : i32, i32
  }
  func.func @transform_3(%arg0: i32) -> (i32, i32, i32) {
    %c0_i32 = arith.constant 0 : i32
    %c0_i32_0 = arith.constant 0 : i32
    %c0_i32_1 = arith.constant 0 : i32
    return %arg0, %c0_i32, %c0_i32_0 : i32, i32, i32
  }
}

module attributes {stable_mosaic.version = 11 : i64} {
  func.func @_bn_relu_kernel(%arg0: i32, %arg1: memref<512x8xbf16, #tpu.memory_space<vmem>>, %arg2: memref<1x8xf32, #tpu.memory_space<vmem>>, %arg3: memref<1x8xf32, #tpu.memory_space<vmem>>, %arg4: memref<512x8xbf16, #tpu.memory_space<vmem>>) attributes {dimension_semantics = [#tpu.dimension_semantics<parallel>], iteration_bounds = array<i64: 1>, scalar_prefetch = 0 : i64, scratch_operands = 0 : i64, tpu.core_type = #tpu.core_type<tc>, window_params = [{transform_indices = @transform_0, window_bounds = array<i64: 512, 8>}, {pipeline_mode = #tpu.pipeline_mode<synchronous>, transform_indices = @transform_1, window_bounds = array<i64: 1, 8>}, {pipeline_mode = #tpu.pipeline_mode<synchronous>, transform_indices = @transform_2, window_bounds = array<i64: 1, 8>}, {transform_indices = @transform_3, window_bounds = array<i64: 512, 8>}]} {
    %c0 = arith.constant 0 : index
    %c0_0 = arith.constant 0 : index
    %0 = vector.load %arg1[%c0, %c0_0] : memref<512x8xbf16, #tpu.memory_space<vmem>>, vector<512x8xbf16>
    %1 = arith.extf %0 : vector<512x8xbf16> to vector<512x8xf32>
    %c0_1 = arith.constant 0 : index
    %c0_2 = arith.constant 0 : index
    %2 = vector.load %arg2[%c0_1, %c0_2] : memref<1x8xf32, #tpu.memory_space<vmem>>, vector<1x8xf32>
    %3 = vector.broadcast %2 : vector<1x8xf32> to vector<512x8xf32>
    %4 = arith.mulf %1, %3 : vector<512x8xf32>
    %c0_3 = arith.constant 0 : index
    %c0_4 = arith.constant 0 : index
    %5 = vector.load %arg3[%c0_3, %c0_4] : memref<1x8xf32, #tpu.memory_space<vmem>>, vector<1x8xf32>
    %6 = vector.broadcast %5 : vector<1x8xf32> to vector<512x8xf32>
    %7 = arith.addf %4, %6 : vector<512x8xf32>
    %cst = arith.constant 0.000000e+00 : f32
    %8 = vector.broadcast %cst : f32 to vector<512x8xf32>
    %9 = arith.maximumf %7, %8 : vector<512x8xf32>
    %10 = arith.truncf %9 : vector<512x8xf32> to vector<512x8xbf16>
    %c0_5 = arith.constant 0 : index
    %c0_6 = arith.constant 0 : index
    %11 = vector.load %arg4[%c0_5, %c0_6] : memref<512x8xbf16, #tpu.memory_space<vmem>>, vector<512x8xbf16>
    tpu.vector_store %arg4[%c0_5, %c0_6], %10 {strides = array<i32>} : memref<512x8xbf16, #tpu.memory_space<vmem>>, vector<512x8xbf16>,
    return
  }
  func.func @transform_0(%arg0: i32) -> (i32, i32) {
    %c0_i32 = arith.constant 0 : i32
    %c0_i32_0 = arith.constant 0 : i32
    return %arg0, %c0_i32 : i32, i32
  }
  func.func @transform_1(%arg0: i32) -> (i32, i32) {
    %c0_i32 = arith.constant 0 : i32
    %c0_i32_0 = arith.constant 0 : i32
    %c0_i32_1 = arith.constant 0 : i32
    return %c0_i32, %c0_i32_0 : i32, i32
  }
  func.func @transform_2(%arg0: i32) -> (i32, i32) {
    %c0_i32 = arith.constant 0 : i32
    %c0_i32_0 = arith.constant 0 : i32
    %c0_i32_1 = arith.constant 0 : i32
    return %c0_i32, %c0_i32_0 : i32, i32
  }
  func.func @transform_3(%arg0: i32) -> (i32, i32) {
    %c0_i32 = arith.constant 0 : i32
    %c0_i32_0 = arith.constant 0 : i32
    return %arg0, %c0_i32 : i32, i32
  }
}

</mosaic_0001>

<llo_original>
// kernel: up_block_forward.4
$region0: #{up_block_forward.4}
  #allocation0 [shape = 'u32[]', space=smem, size = 0x4, offset = 0x4, fixed_abs, tag = 'smem constant byte address 0x4 - core index']
  #allocation1 [shape = 'u32[144,128]{1,0:T(1,128)}', space=vmem, size = 0x12000, scoped, tag = 'internal scratch']
  %s0 = inlined_call_operand.vmem [shape: bf16[512,72], index: 0, kind: input, shape index: {}]
  %s1 = inlined_call_operand.vmem [shape: bf16[72,8], index: 1, kind: input, shape index: {}]
  %s2 = inlined_call_operand.vmem [shape: bf16[512,8], index: 2, kind: output, shape index: {0}]
  %s3 = inlined_call_operand.vmem [shape: f32[2,2,8], index: 3, kind: output, shape index: {1}]
  %4 = xla_tuple %s2, %s3
  %s5 = sld [smem:[#allocation0]]
  $region49: #{up_block_forward.4} parent=0
    _
  %s7 = ssub.s32 1, %s5
  %s8 = scalar_select 0, %s7, %s5
  loop: start=0, step=1, limit=4
  $region2: #{up_block_forward.4} parent=0 // loop_pre_header
    _
  $region3: #{up_block_forward.4} parent=0 // loop_header
    %s10 = sphi 0, %s14
    %p11 = scmp.ge.s32.totalorder %s10, 4
    %s20 = sphi 0, %s22
    %s23 = sphi 0, %s20
    %s24 = sphi 0, %s23
    %s40 = sphi 0, %s24
    %s44 = sphi 0, %s44
    %s46 = sphi 0, %s44
    %s47 = sphi 0, %s46
    %s61 = sphi 0, %s47
    %s67 = sphi 0, %s69
    %s70 = sphi 0, %s67
    %s71 = sphi 0, %s70
    %s87 = sphi 0, %s71
    %s93 = sphi 0, %s95
    %s96 = sphi 0, %s93
    %s97 = sphi 0, %s96
    %s113 = sphi 0, %s97
  $region4: #{up_block_forward.4} parent=0 // loop_header_branch
    %13 = sbr.rel (%p11) target = $region8
  $region5: #{up_block_forward.4} parent=0 // loop_body
    %s15 = ssub.s32 %s10, 1
    %s16 = ssub.s32 %s10, 2
    %s17 = sadd.s32 %s10, 1
    %s18 = ssub.s32 %s10, %s17
    %p19 = scmp.eq.s32.totalorder %s18, 0
    %s21 = sadd.s32 %s20, 1
    %s22 = scalar_select %p19, %s20, %s21
    %p25 = pneg %p19
    %p26 = scmp.eq.s32.totalorder %s10, 1
    %p27 = por %p25, %p26
    %p28 = scmp.ne.s32.totalorder %s20, %s23
    %p29 = scmp.eq.s32.totalorder %s10, 0
    %p30 = por %p28, %p29
    %p31 = scmp.ne.s32.totalorder %s20, %s23
    %p32 = scmp.eq.s32.totalorder %s15, 1
    %p33 = por %p31, %p32
    %p34 = scmp.ne.s32.totalorder %s23, %s24
    %p35 = scmp.eq.s32.totalorder %s15, 0
    %p36 = por %p34, %p35
    %p37 = scmp.ne.s32.totalorder %s23, %s24
    %p38 = scmp.eq.s32.totalorder %s16, 1
    %p39 = por %p37, %p38
    %p41 = scmp.ne.s32.totalorder %s24, %s40
    %p42 = scmp.eq.s32.totalorder %s16, 0
    %p43 = por %p41, %p42
    %s45 = sadd.s32 %s44, 1
    %p48 = scmp.eq.s32.totalorder %s10, 1
    %p49 = scmp.ne.s32.totalorder %s44, %s46
    %p50 = scmp.eq.s32.totalorder %s10, 0
    %p51 = por %p49, %p50
    %p52 = scmp.ne.s32.totalorder %s44, %s46
    %p53 = scmp.eq.s32.totalorder %s15, 1
    %p54 = por %p52, %p53
    %p55 = scmp.ne.s32.totalorder %s46, %s47
    %p56 = scmp.eq.s32.totalorder %s15, 0
    %p57 = por %p55, %p56
    %p58 = scmp.ne.s32.totalorder %s46, %s47
    %p59 = scmp.eq.s32.totalorder %s16, 1
    %p60 = por %p58, %p59
    %p62 = scmp.ne.s32.totalorder %s47, %s61
    %p63 = scmp.eq.s32.totalorder %s16, 0
    %p64 = por %p62, %p63
    %s65 = ssub.s32 %s10, %s17
    %p66 = scmp.eq.s32.totalorder %s65, 0
    %s68 = sadd.s32 %s67, 1
    %s69 = scalar_select %p66, %s67, %s68
    %p72 = pneg %p66
    %p73 = scmp.eq.s32.totalorder %s10, 1
    %p74 = por %p72, %p73
    %p75 = scmp.ne.s32.totalorder %s67, %s70
    %p76 = scmp.eq.s32.totalorder %s10, 0
    %p77 = por %p75, %p76
    %p78 = scmp.ne.s32.totalorder %s67, %s70
    %p79 = scmp.eq.s32.totalorder %s15, 1
    %p80 = por %p78, %p79
    %p81 = scmp.ne.s32.totalorder %s70, %s71
    %p82 = scmp.eq.s32.totalorder %s15, 0
    %p83 = por %p81, %p82
    %p84 = scmp.ne.s32.totalorder %s70, %s71
    %p85 = scmp.eq.s32.totalorder %s16, 1
    %p86 = por %p84, %p85
    %p88 = scmp.ne.s32.totalorder %s71, %s87
    %p89 = scmp.eq.s32.totalorder %s16, 0
    %p90 = por %p88, %p89
    %s91 = ssub.s32 %s10, %s17
    %p92 = scmp.eq.s32.totalorder %s91, 0
    %s94 = sadd.s32 %s93, 1
    %s95 = scalar_select %p92, %s93, %s94
    %p98 = pneg %p92
    %p99 = scmp.eq.s32.totalorder %s10, 1
    %p100 = por %p98, %p99
    %p101 = scmp.ne.s32.totalorder %s93, %s96
    %p102 = scmp.eq.s32.totalorder %s10, 0
    %p103 = por %p101, %p102
    %p104 = scmp.ne.s32.totalorder %s93, %s96
    %p105 = scmp.eq.s32.totalorder %s15, 1
    %p106 = por %p104, %p105
    %p107 = scmp.ne.s32.totalorder %s96, %s97
    %p108 = scmp.eq.s32.totalorder %s15, 0
    %p109 = por %p107, %p108
    %p110 = scmp.ne.s32.totalorder %s96, %s97
    %p111 = scmp.eq.s32.totalorder %s16, 1
    %p112 = por %p110, %p111
    %p114 = scmp.ne.s32.totalorder %s97, %s113
    %p115 = scmp.eq.s32.totalorder %s16, 0
    %p116 = por %p114, %p115
    %p117 = scmp.le.s32.totalorder 1, %s10
    %p118 = scmp.lt.s32.totalorder %s10, 3
    %p119 = pnand %p117, %p118
    %p120 = pneg %p119
    // Predicated region
    $region9: #{up_block_forward.4} parent=5 // pred_check
      _
    $region10: #{up_block_forward.4} parent=5 // pred_check_branch
      %122 = sbr.rel (%p119) target = $region12
    $region11: #{up_block_forward.4} parent=5 // pred_region
      %s123 = ssub.s32 %s10, 1
      // Predicated region
      $region13: #{up_block_forward.4} parent=11 // pred_check
        %p124 = pneg %p57
      $region14: #{up_block_forward.4} parent=11 // pred_check_branch
        %126 = sbr.rel (%p124) target = $region16
      $region15: #{up_block_forward.4} parent=11 // pred_region
        _
      $region16: #{up_block_forward.4} parent=11 // pred_fallthru
        _
    $region12: #{up_block_forward.4} parent=5 // pred_fallthru
      _
    %p127 = scmp.lt.s32.totalorder %s10, 2
    // Predicated region
    $region17: #{up_block_forward.4} parent=5 // pred_check
      %p128 = pneg %p127
    $region18: #{up_block_forward.4} parent=5 // pred_check_branch
      %130 = sbr.rel (%p128) target = $region20
    $region19: #{up_block_forward.4} parent=5 // pred_region
      // Predicated region
      $region21: #{up_block_forward.4} parent=19 // pred_check
        %p131 = pneg %p30
      $region22: #{up_block_forward.4} parent=19 // pred_check_branch
        %133 = sbr.rel (%p131) target = $region24
      $region23: #{up_block_forward.4} parent=19 // pred_region
        %s134 = smul.u32 32, %s10
        %p135 = scmp.lt.s32.totalorder %s134, 63
        %s136 = scalar_select %p135, %s134, 63
        %s137 = smul.addr %s136, 4
        %s138 = scalar_lea.vmem %s0, %s137
        %s139 = smul.u32 32, %s10
      $region24: #{up_block_forward.4} parent=19 // pred_fallthru
        _
    $region20: #{up_block_forward.4} parent=5 // pred_fallthru
      _
    %p140 = scmp.le.s32.totalorder 1, %s10
    %p141 = scmp.lt.s32.totalorder %s10, 3
    %p142 = pnand %p140, %p141
    %p143 = pneg %p142
    // Predicated region
    $region25: #{up_block_forward.4} parent=5 // pred_check
      _
    $region26: #{up_block_forward.4} parent=5 // pred_check_branch
      %145 = sbr.rel (%p142) target = $region28
    $region27: #{up_block_forward.4} parent=5 // pred_region
      %s146 = ssub.s32 %s10, 1
      %s147 = smul.u32 32, %s15
      %p148 = scmp.lt.s32.totalorder %s147, 63
      %s149 = scalar_select %p148, %s147, 63
      %s150 = smul.addr %s149, 4
      %s151 = scalar_lea.vmem %s0, %s150
      %p152 = pneg %p36
      %p153 = pneg %p33
      %p154 = pneg %p57
      %p155 = pneg %p54
      %p156 = pneg %p83
      %p157 = pneg %p80
      %s158 = smul.u32 32, %s15
      %p159 = scmp.lt.s32.totalorder %s158, 63
      %s160 = scalar_select %p159, %s158, 63
      %s161 = smul.addr %s160, 4
      %s162 = scalar_lea.vmem %s2, %s161
      %p163 = pneg %p109
      %p164 = pneg %p106
      %p165 = scmp.lt.s32.totalorder %s15, 1
      %s166 = scalar_select %p165, %s15, 1
      %s167 = smul.addr %s166, 2
      %s168 = scalar_lea.vmem %s3, %s167
      %s169 = smul.u32 32, %s15
      %p170 = scmp.lt.s32.totalorder %s169, 63
      %s171 = scalar_select %p170, %s169, 63
      %s172 = smul.addr %s171, 4
      %s173 = scalar_lea.vmem %s0, %s172
      %s174 = smul.u32 32, %s15
      %s175 = smul.u32 32, %s15
      %p176 = scmp.lt.s32.totalorder %s175, 63
      %s177 = scalar_select %p176, %s175, 63
      %s178 = smul.addr %s177, 4
      %s179 = scalar_lea.vmem %s2, %s178
      %s180 = smul.u32 32, %s15
      %p181 = scmp.lt.s32.totalorder %s15, 1
      %s182 = scalar_select %p181, %s15, 1
      %s183 = smul.addr %s182, 2
      %s184 = scalar_lea.vmem %s3, %s183
      %v186 = vld [vmem:[%s173] sm:$0xf]
      %v187 = vld [vmem:[%s173 + $0x4] sm:$0xf]
      %v188 = vld [vmem:[%s173 + $0x8] sm:$0xf]
      %v189 = vld [vmem:[%s173 + $0xc] sm:$0xf]
      %v190 = vld [vmem:[%s173 + $0x10] sm:$0xf]
      %v191 = vld [vmem:[%s173 + $0x14] sm:$0xf]
      %v192 = vld [vmem:[%s173 + $0x18] sm:$0xf]
      %v193 = vld [vmem:[%s173 + $0x1c] sm:$0xf]
      %v194 = vld [vmem:[%s173 + $0x20] sm:$0xf]
      %v195 = vld [vmem:[%s173 + $0x24] sm:$0xf]
      %v196 = vld [vmem:[%s173 + $0x28] sm:$0xf]
      %v197 = vld [vmem:[%s173 + $0x2c] sm:$0xf]
      %v198 = vld [vmem:[%s173 + $0x30] sm:$0xf]
      %v199 = vld [vmem:[%s173 + $0x34] sm:$0xf]
      %v200 = vld [vmem:[%s173 + $0x38] sm:$0xf]
      %v201 = vld [vmem:[%s173 + $0x3c] sm:$0xf]
      %v202 = vld [vmem:[%s173 + $0x40] sm:$0xf]
      %v203 = vld [vmem:[%s173 + $0x44] sm:$0xf]
      %v204 = vld [vmem:[%s173 + $0x48] sm:$0xf]
      %v205 = vld [vmem:[%s173 + $0x4c] sm:$0xf]
      %v206 = vld [vmem:[%s173 + $0x50] sm:$0xf]
      %v207 = vld [vmem:[%s173 + $0x54] sm:$0xf]
      %v208 = vld [vmem:[%s173 + $0x58] sm:$0xf]
      %v209 = vld [vmem:[%s173 + $0x5c] sm:$0xf]
      %v210 = vld [vmem:[%s173 + $0x60] sm:$0xf]
      %v211 = vld [vmem:[%s173 + $0x64] sm:$0xf]
      %v212 = vld [vmem:[%s173 + $0x68] sm:$0xf]
      %v213 = vld [vmem:[%s173 + $0x6c] sm:$0xf]
      %v214 = vld [vmem:[%s173 + $0x70] sm:$0xf]
      %v215 = vld [vmem:[%s173 + $0x74] sm:$0xf]
      %v216 = vld [vmem:[%s173 + $0x78] sm:$0xf]
      %v217 = vld [vmem:[%s173 + $0x7c] sm:$0xf]
      %v218 = vld [vmem:[%s1] sm:$0xf]
      %v219 = vld [vmem:[%s1 + $0x4] sm:$0xf]
      %v220 = vld [vmem:[%s1 + $0x8] sm:$0xf]
      %v221 = vld [vmem:[%s1 + $0xc] sm:$0xf]
      %v222 = vld [vmem:[%s1 + $0x10] sm:$0xf]
      %v223 = vld [vmem:[%s1 + $0x14] sm:$0xf]
      %v224 = vld [vmem:[%s1 + $0x18] sm:$0xf]
      %v225 = vld [vmem:[%s1 + $0x1c] sm:$0xf]
      %v226 = vld [vmem:[%s1 + $0x20] sm:$0xf]
      %v259 = vunpack.c.l.b16 %v186
      %v260 = vunpack.c.l.b16 %v187
      %v261 = vunpack.c.l.b16 %v188
      %v262 = vunpack.c.l.b16 %v189
      %v263 = vunpack.c.l.b16 %v190
      %v264 = vunpack.c.l.b16 %v191
      %v265 = vunpack.c.l.b16 %v192
      %v266 = vunpack.c.l.b16 %v193
      %v267 = vunpack.c.l.b16 %v194
      %v268 = vunpack.c.l.b16 %v195
      %v269 = vunpack.c.l.b16 %v196
      %v270 = vunpack.c.l.b16 %v197
      %v271 = vunpack.c.l.b16 %v198
      %v272 = vunpack.c.l.b16 %v199
      %v273 = vunpack.c.l.b16 %v200
      %v274 = vunpack.c.l.b16 %v201
      %v275 = vunpack.c.l.b16 %v202
      %v276 = vunpack.c.l.b16 %v203
      %v277 = vunpack.c.l.b16 %v204
      %v278 = vunpack.c.l.b16 %v205
      %v279 = vunpack.c.l.b16 %v206
      %v280 = vunpack.c.l.b16 %v207
      %v281 = vunpack.c.l.b16 %v208
      %v282 = vunpack.c.l.b16 %v209
      %v283 = vunpack.c.l.b16 %v210
      %v284 = vunpack.c.l.b16 %v211
      %v285 = vunpack.c.l.b16 %v212
      %v286 = vunpack.c.l.b16 %v213
      %v287 = vunpack.c.l.b16 %v214
      %v288 = vunpack.c.l.b16 %v215
      %v289 = vunpack.c.l.b16 %v216
      %v290 = vunpack.c.l.b16 %v217
      %v291 = vpack.c.b16 %v260, %v259
      %v292 = vpack.c.b16 %v262, %v261
      %v293 = vpack.c.b16 %v264, %v263
      %v294 = vpack.c.b16 %v266, %v265
      %v295 = vpack.c.b16 %v268, %v267
      %v296 = vpack.c.b16 %v270, %v269
      %v297 = vpack.c.b16 %v272, %v271
      %v298 = vpack.c.b16 %v274, %v273
      %v299 = vpack.c.b16 %v276, %v275
      %v300 = vpack.c.b16 %v278, %v277
      %v301 = vpack.c.b16 %v280, %v279
      %v302 = vpack.c.b16 %v282, %v281
      %v303 = vpack.c.b16 %v284, %v283
      %v304 = vpack.c.b16 %v286, %v285
      %v305 = vpack.c.b16 %v288, %v287
      %v306 = vpack.c.b16 %v290, %v289
      %v316 = vunpack.c.l.b16 %v218
      %v317 = vunpack.c.l.b16 %v219
      %v318 = vunpack.c.l.b16 %v220
      %v319 = vunpack.c.l.b16 %v221
      %v320 = vunpack.c.l.b16 %v222
      %v321 = vunpack.c.l.b16 %v223
      %v322 = vunpack.c.l.b16 %v224
      %v323 = vunpack.c.l.b16 %v225
      %v324 = vunpack.c.l.b16 %v226
      %v325 = vpack.c.b16 %v317, %v316
      %v326 = vpack.c.b16 %v319, %v318
      %v327 = vpack.c.b16 %v321, %v320
      %v328 = vpack.c.b16 %v323, %v322
      %v329 = vpack.c.b16 %v324, %v324
      %vm334 = vcmask 588800
      %v336 = vsel %vm334, %v291, 0
      %v339 = vsel %vm334, %v292, 0
      %v342 = vsel %vm334, %v293, 0
      %v345 = vsel %vm334, %v294, 0
      %v348 = vsel %vm334, %v295, 0
      %v351 = vsel %vm334, %v296, 0
      %v354 = vsel %vm334, %v297, 0
      %v357 = vsel %vm334, %v298, 0
      %v360 = vsel %vm334, %v299, 0
      %v363 = vsel %vm334, %v300, 0
      %v366 = vsel %vm334, %v301, 0
      %v369 = vsel %vm334, %v302, 0
      %v372 = vsel %vm334, %v303, 0
      %v375 = vsel %vm334, %v304, 0
      %v378 = vsel %vm334, %v305, 0
      %v381 = vsel %vm334, %v306, 0
      %vm383 = vcmask 1043456
      %v385 = vsel %vm383, %v329, 0
      %387 = vmatprep.subr.bf16.mxu0 0
      %388 = vmatpush1.bf16.msra.mxu0 %v325
      %389 = vmatprep.subr.bf16.mxu0 0
      %390 = vmatpush1.bf16.msra.mxu0 %v326
      %391 = vmatprep.subr.bf16.mxu0 0
      %392 = vmatpush1.bf16.msra.mxu0 %v327
      %393 = vmatprep.subr.bf16.mxu0 0
      %394 = vmatpush1.bf16.msra.mxu0 %v328
      %395 = vmatprep.subr.bf16.mxu0 0
      %396 = vmatpush1.bf16.msra.mxu0 %v385
      %397 = vmatprep.subr.bf16.mxu0 0
      %398 = vmatpush1.bf16.msra.mxu0 0
      %399 = vmatprep.subr.bf16.mxu0 0
      %400 = vmatpush1.bf16.msra.mxu0 0
      %401 = vmatprep.subr.bf16.mxu0 0
      %402 = vmatpush1.bf16.msra.mxu0 0
      %403 = vmatprep.subr.bf16.mxu0 0
      %404 = vmatpush1.bf16.msra.mxu0 0
      %405 = vmatprep.subr.bf16.mxu0 0
      %406 = vmatpush1.bf16.msra.mxu0 0
      %407 = vmatprep.subr.bf16.mxu0 0
      %408 = vmatpush1.bf16.msra.mxu0 0
      %409 = vmatprep.subr.bf16.mxu0 0
      %410 = vmatpush1.bf16.msra.mxu0 0
      %411 = vmatprep.subr.bf16.mxu0 0
      %412 = vmatpush1.bf16.msra.mxu0 0
      %413 = vmatprep.subr.bf16.mxu0 0
      %414 = vmatpush1.bf16.msra.mxu0 0
      %415 = vmatprep.subr.bf16.mxu0 0
      %416 = vmatpush1.bf16.msra.mxu0 0
      %417 = vmatprep.subr.bf16.mxu0 0
      %418 = vmatpush1.bf16.msra.mxu0 0
      %419 = vmatprep.mubr.bf16.mxu0 0
      %420 = vmatmul.mubr.bf16.gmra.mrb[0].mxu0 %v336
      %v421 = vpop.f32.mrb[0].mxu0
      %v422 = vadd.f32 0.0, %v421
      %v423 = vpop.f32.mrb[0].mxu0
      %v424 = vpop.f32.mrb[0].mxu0
      %v425 = vadd.f32 0.0, %v424
      %v426 = vpop.f32.mrb[0].mxu0
      %427 = vmatprep.mubr.bf16.mxu0 0
      %428 = vmatmul.mubr.bf16.gmra.mrb[0].mxu0 %v339
      %v429 = vpop.f32.mrb[0].mxu0
      %v430 = vadd.f32 0.0, %v429
      %v431 = vpop.f32.mrb[0].mxu0
      %v432 = vpop.f32.mrb[0].mxu0
      %v433 = vadd.f32 0.0, %v432
      %v434 = vpop.f32.mrb[0].mxu0
      %435 = vmatprep.mubr.bf16.mxu0 0
      %436 = vmatmul.mubr.bf16.gmra.mrb[0].mxu0 %v342
      %v437 = vpop.f32.mrb[0].mxu0
      %v438 = vadd.f32 0.0, %v437
      %v439 = vpop.f32.mrb[0].mxu0
      %v440 = vpop.f32.mrb[0].mxu0
      %v441 = vadd.f32 0.0, %v440
      %v442 = vpop.f32.mrb[0].mxu0
      %443 = vmatprep.mubr.bf16.mxu0 0
      %444 = vmatmul.mubr.bf16.gmra.mrb[0].mxu0 %v345
      %v445 = vpop.f32.mrb[0].mxu0
      %v446 = vadd.f32 0.0, %v445
      %v447 = vpop.f32.mrb[0].mxu0
      %v448 = vpop.f32.mrb[0].mxu0
      %v449 = vadd.f32 0.0, %v448
      %v450 = vpop.f32.mrb[0].mxu0
      %451 = vmatprep.mubr.bf16.mxu0 0
      %452 = vmatmul.mubr.bf16.gmra.mrb[0].mxu0 %v348
      %v453 = vpop.f32.mrb[0].mxu0
      %v454 = vadd.f32 0.0, %v453
      %v455 = vpop.f32.mrb[0].mxu0
      %v456 = vpop.f32.mrb[0].mxu0
      %v457 = vadd.f32 0.0, %v456
      %v458 = vpop.f32.mrb[0].mxu0
      %459 = vmatprep.mubr.bf16.mxu0 0
      %460 = vmatmul.mubr.bf16.gmra.mrb[0].mxu0 %v351
      %v461 = vpop.f32.mrb[0].mxu0
      %v462 = vadd.f32 0.0, %v461
      %v463 = vpop.f32.mrb[0].mxu0
      %v464 = vpop.f32.mrb[0].mxu0
      %v465 = vadd.f32 0.0, %v464
      %v466 = vpop.f32.mrb[0].mxu0
      %467 = vmatprep.mubr.bf16.mxu0 0
      %468 = vmatmul.mubr.bf16.gmra.mrb[0].mxu0 %v354
      %v469 = vpop.f32.mrb[0].mxu0
      %v470 = vadd.f32 0.0, %v469
      %v471 = vpop.f32.mrb[0].mxu0
      %v472 = vpop.f32.mrb[0].mxu0
      %v473 = vadd.f32 0.0, %v472
      %v474 = vpop.f32.mrb[0].mxu0
      %475 = vmatprep.mubr.bf16.mxu0 0
      %476 = vmatmul.mubr.bf16.gmra.mrb[0].mxu0 %v357
      %v477 = vpop.f32.mrb[0].mxu0
      %v478 = vadd.f32 0.0, %v477
      %v479 = vpop.f32.mrb[0].mxu0
      %v480 = vpop.f32.mrb[0].mxu0
      %v481 = vadd.f32 0.0, %v480
      %v482 = vpop.f32.mrb[0].mxu0
      %483 = vmatprep.mubr.bf16.mxu0 0
      %484 = vmatmul.mubr.bf16.gmra.mrb[0].mxu0 %v360
      %v485 = vpop.f32.mrb[0].mxu0
      %v486 = vadd.f32 0.0, %v485
      %v487 = vpop.f32.mrb[0].mxu0
      %v488 = vpop.f32.mrb[0].mxu0
      %v489 = vadd.f32 0.0, %v488
      %v490 = vpop.f32.mrb[0].mxu0
      %491 = vmatprep.mubr.bf16.mxu0 0
      %492 = vmatmul.mubr.bf16.gmra.mrb[0].mxu0 %v363
      %v493 = vpop.f32.mrb[0].mxu0
      %v494 = vadd.f32 0.0, %v493
      %v495 = vpop.f32.mrb[0].mxu0
      %v496 = vpop.f32.mrb[0].mxu0
      %v497 = vadd.f32 0.0, %v496
      %v498 = vpop.f32.mrb[0].mxu0
      %499 = vmatprep.mubr.bf16.mxu0 0
      %500 = vmatmul.mubr.bf16.gmra.mrb[0].mxu0 %v366
      %v501 = vpop.f32.mrb[0].mxu0
      %v502 = vadd.f32 0.0, %v501
      %v503 = vpop.f32.mrb[0].mxu0
      %v504 = vpop.f32.mrb[0].mxu0
      %v505 = vadd.f32 0.0, %v504
      %v506 = vpop.f32.mrb[0].mxu0
      %507 = vmatprep.mubr.bf16.mxu0 0
      %508 = vmatmul.mubr.bf16.gmra.mrb[0].mxu0 %v369
      %v509 = vpop.f32.mrb[0].mxu0
      %v510 = vadd.f32 0.0, %v509
      %v511 = vpop.f32.mrb[0].mxu0
      %v512 = vpop.f32.mrb[0].mxu0
      %v513 = vadd.f32 0.0, %v512
      %v514 = vpop.f32.mrb[0].mxu0
      %515 = vmatprep.mubr.bf16.mxu0 0
      %516 = vmatmul.mubr.bf16.gmra.mrb[0].mxu0 %v372
      %v517 = vpop.f32.mrb[0].mxu0
      %v518 = vadd.f32 0.0, %v517
      %v519 = vpop.f32.mrb[0].mxu0
      %v520 = vpop.f32.mrb[0].mxu0
      %v521 = vadd.f32 0.0, %v520
      %v522 = vpop.f32.mrb[0].mxu0
      %523 = vmatprep.mubr.bf16.mxu0 0
      %524 = vmatmul.mubr.bf16.gmra.mrb[0].mxu0 %v375
      %v525 = vpop.f32.mrb[0].mxu0
      %v526 = vadd.f32 0.0, %v525
      %v527 = vpop.f32.mrb[0].mxu0
      %v528 = vpop.f32.mrb[0].mxu0
      %v529 = vadd.f32 0.0, %v528
      %v530 = vpop.f32.mrb[0].mxu0
      %531 = vmatprep.mubr.bf16.mxu0 0
      %532 = vmatmul.mubr.bf16.gmra.mrb[0].mxu0 %v378
      %v533 = vpop.f32.mrb[0].mxu0
      %v534 = vadd.f32 0.0, %v533
      %v535 = vpop.f32.mrb[0].mxu0
      %v536 = vpop.f32.mrb[0].mxu0
      %v537 = vadd.f32 0.0, %v536
      %v538 = vpop.f32.mrb[0].mxu0
      %539 = vmatprep.mubr.bf16.mxu0 0
      %540 = vmatmul.mubr.bf16.gmra.mrb[0].mxu0 %v381
      %v541 = vpop.f32.mrb[0].mxu0
      %v542 = vadd.f32 0.0, %v541
      %v543 = vpop.f32.mrb[0].mxu0
      %v544 = vpop.f32.mrb[0].mxu0
      %v545 = vadd.f32 0.0, %v544
      %v546 = vpop.f32.mrb[0].mxu0
      %547 = vdwg.mxu0
      %v548 = vpack.c.bf16 %v425, %v422
      %v549 = vpack.c.bf16 %v433, %v430
      %v550 = vpack.c.bf16 %v441, %v438
      %v551 = vpack.c.bf16 %v449, %v446
      %v552 = vpack.c.bf16 %v457, %v454
      %v553 = vpack.c.bf16 %v465, %v462
      %v554 = vpack.c.bf16 %v473, %v470
      %v555 = vpack.c.bf16 %v481, %v478
      %v556 = vpack.c.bf16 %v489, %v486
      %v557 = vpack.c.bf16 %v497, %v494
      %v558 = vpack.c.bf16 %v505, %v502
      %v559 = vpack.c.bf16 %v513, %v510
      %v560 = vpack.c.bf16 %v521, %v518
      %v561 = vpack.c.bf16 %v529, %v526
      %v562 = vpack.c.bf16 %v537, %v534
      %v563 = vpack.c.bf16 %v545, %v542
      %v580 = vunpack.c.l.b16 %v548
      %v581 = vunpack.c.h.b16 %v548
      %v582 = vunpack.c.l.b16 %v549
      %v583 = vunpack.c.h.b16 %v549
      %v584 = vunpack.c.l.b16 %v550
      %v585 = vunpack.c.h.b16 %v550
      %v586 = vunpack.c.l.b16 %v551
      %v587 = vunpack.c.h.b16 %v551
      %v588 = vunpack.c.l.b16 %v552
      %v589 = vunpack.c.h.b16 %v552
      %v590 = vunpack.c.l.b16 %v553
      %v591 = vunpack.c.h.b16 %v553
      %v592 = vunpack.c.l.b16 %v554
      %v593 = vunpack.c.h.b16 %v554
      %v594 = vunpack.c.l.b16 %v555
      %v595 = vunpack.c.h.b16 %v555
      %v596 = vunpack.c.l.b16 %v556
      %v597 = vunpack.c.h.b16 %v556
      %v598 = vunpack.c.l.b16 %v557
      %v599 = vunpack.c.h.b16 %v557
      %v600 = vunpack.c.l.b16 %v558
      %v601 = vunpack.c.h.b16 %v558
      %v602 = vunpack.c.l.b16 %v559
      %v603 = vunpack.c.h.b16 %v559
      %v604 = vunpack.c.l.b16 %v560
      %v605 = vunpack.c.h.b16 %v560
      %v606 = vunpack.c.l.b16 %v561
      %v607 = vunpack.c.h.b16 %v561
      %v608 = vunpack.c.l.b16 %v562
      %v609 = vunpack.c.h.b16 %v562
      %v610 = vunpack.c.l.b16 %v563
      %v611 = vunpack.c.h.b16 %v563
      %v612 = vpack.c.b16 %v580, %v580
      %v613 = vpack.c.b16 %v581, %v581
      %v614 = vpack.c.b16 %v582, %v582
      %v615 = vpack.c.b16 %v583, %v583
      %v616 = vpack.c.b16 %v584, %v584
      %v617 = vpack.c.b16 %v585, %v585
      %v618 = vpack.c.b16 %v586, %v586
      %v619 = vpack.c.b16 %v587, %v587
      %v620 = vpack.c.b16 %v588, %v588
      %v621 = vpack.c.b16 %v589, %v589
      %v622 = vpack.c.b16 %v590, %v590
      %v623 = vpack.c.b16 %v591, %v591
      %v624 = vpack.c.b16 %v592, %v592
      %v625 = vpack.c.b16 %v593, %v593
      %v626 = vpack.c.b16 %v594, %v594
      %v627 = vpack.c.b16 %v595, %v595
      %v628 = vpack.c.b16 %v596, %v596
      %v629 = vpack.c.b16 %v597, %v597
      %v630 = vpack.c.b16 %v598, %v598
      %v631 = vpack.c.b16 %v599, %v599
      %v632 = vpack.c.b16 %v600, %v600
      %v633 = vpack.c.b16 %v601, %v601
      %v634 = vpack.c.b16 %v602, %v602
      %v635 = vpack.c.b16 %v603, %v603
      %v636 = vpack.c.b16 %v604, %v604
      %v637 = vpack.c.b16 %v605, %v605
      %v638 = vpack.c.b16 %v606, %v606
      %v639 = vpack.c.b16 %v607, %v607
      %v640 = vpack.c.b16 %v608, %v608
      %v641 = vpack.c.b16 %v609, %v609
      %v642 = vpack.c.b16 %v610, %v610
      %v643 = vpack.c.b16 %v611, %v611
      %vm676 = vcmask 60416
      %677 = vst.msk [vmem:[%s179] sm:$0xf] %vm676, %v612
      %678 = vst.msk [vmem:[%s179 + $0x4] sm:$0xf] %vm676, %v613
      %679 = vst.msk [vmem:[%s179 + $0x8] sm:$0xf] %vm676, %v614
      %680 = vst.msk [vmem:[%s179 + $0xc] sm:$0xf] %vm676, %v615
      %681 = vst.msk [vmem:[%s179 + $0x10] sm:$0xf] %vm676, %v616
      %682 = vst.msk [vmem:[%s179 + $0x14] sm:$0xf] %vm676, %v617
      %683 = vst.msk [vmem:[%s179 + $0x18] sm:$0xf] %vm676, %v618
      %684 = vst.msk [vmem:[%s179 + $0x1c] sm:$0xf] %vm676, %v619
      %685 = vst.msk [vmem:[%s179 + $0x20] sm:$0xf] %vm676, %v620
      %686 = vst.msk [vmem:[%s179 + $0x24] sm:$0xf] %vm676, %v621
      %687 = vst.msk [vmem:[%s179 + $0x28] sm:$0xf] %vm676, %v622
      %688 = vst.msk [vmem:[%s179 + $0x2c] sm:$0xf] %vm676, %v623
      %689 = vst.msk [vmem:[%s179 + $0x30] sm:$0xf] %vm676, %v624
      %690 = vst.msk [vmem:[%s179 + $0x34] sm:$0xf] %vm676, %v625
      %691 = vst.msk [vmem:[%s179 + $0x38] sm:$0xf] %vm676, %v626
      %692 = vst.msk [vmem:[%s179 + $0x3c] sm:$0xf] %vm676, %v627
      %693 = vst.msk [vmem:[%s179 + $0x40] sm:$0xf] %vm676, %v628
      %694 = vst.msk [vmem:[%s179 + $0x44] sm:$0xf] %vm676, %v629
      %695 = vst.msk [vmem:[%s179 + $0x48] sm:$0xf] %vm676, %v630
      %696 = vst.msk [vmem:[%s179 + $0x4c] sm:$0xf] %vm676, %v631
      %697 = vst.msk [vmem:[%s179 + $0x50] sm:$0xf] %vm676, %v632
      %698 = vst.msk [vmem:[%s179 + $0x54] sm:$0xf] %vm676, %v633
      %699 = vst.msk [vmem:[%s179 + $0x58] sm:$0xf] %vm676, %v634
      %700 = vst.msk [vmem:[%s179 + $0x5c] sm:$0xf] %vm676, %v635
      %701 = vst.msk [vmem:[%s179 + $0x60] sm:$0xf] %vm676, %v636
      %702 = vst.msk [vmem:[%s179 + $0x64] sm:$0xf] %vm676, %v637
      %703 = vst.msk [vmem:[%s179 + $0x68] sm:$0xf] %vm676, %v638
      %704 = vst.msk [vmem:[%s179 + $0x6c] sm:$0xf] %vm676, %v639
      %705 = vst.msk [vmem:[%s179 + $0x70] sm:$0xf] %vm676, %v640
      %706 = vst.msk [vmem:[%s179 + $0x74] sm:$0xf] %vm676, %v641
      %707 = vst.msk [vmem:[%s179 + $0x78] sm:$0xf] %vm676, %v642
      %708 = vst.msk [vmem:[%s179 + $0x7c] sm:$0xf] %vm676, %v643
      %vm709 = vcmask 64512
      %v710 = vsel %vm709, %v422, 0.0
      %v711 = vsel %vm709, %v425, 0.0
      %v712 = vadd.f32 %v710, %v711
      %v713 = vsel %vm709, %v430, 0.0
      %v714 = vadd.f32 %v712, %v713
      %v715 = vsel %vm709, %v433, 0.0
      %v716 = vadd.f32 %v714, %v715
      %v717 = vsel %vm709, %v438, 0.0
      %v718 = vadd.f32 %v716, %v717
      %v719 = vsel %vm709, %v441, 0.0
      %v720 = vadd.f32 %v718, %v719
      %v721 = vsel %vm709, %v446, 0.0
      %v722 = vadd.f32 %v720, %v721
      %v723 = vsel %vm709, %v449, 0.0
      %v724 = vadd.f32 %v722, %v723
      %v725 = vsel %vm709, %v454, 0.0
      %v726 = vadd.f32 %v724, %v725
      %v727 = vsel %vm709, %v457, 0.0
      %v728 = vadd.f32 %v726, %v727
      %v729 = vsel %vm709, %v462, 0.0
      %v730 = vadd.f32 %v728, %v729
      %v731 = vsel %vm709, %v465, 0.0
      %v732 = vadd.f32 %v730, %v731
      %v733 = vsel %vm709, %v470, 0.0
      %v734 = vadd.f32 %v732, %v733
      %v735 = vsel %vm709, %v473, 0.0
      %v736 = vadd.f32 %v734, %v735
      %v737 = vsel %vm709, %v478, 0.0
      %v738 = vadd.f32 %v736, %v737
      %v739 = vsel %vm709, %v481, 0.0
      %v740 = vadd.f32 %v738, %v739
      %v741 = vsel %vm709, %v486, 0.0
      %v742 = vadd.f32 %v740, %v741
      %v743 = vsel %vm709, %v489, 0.0
      %v744 = vadd.f32 %v742, %v743
      %v745 = vsel %vm709, %v494, 0.0
      %v746 = vadd.f32 %v744, %v745
      %v747 = vsel %vm709, %v497, 0.0
      %v748 = vadd.f32 %v746, %v747
      %v749 = vsel %vm709, %v502, 0.0
      %v750 = vadd.f32 %v748, %v749
      %v751 = vsel %vm709, %v505, 0.0
      %v752 = vadd.f32 %v750, %v751
      %v753 = vsel %vm709, %v510, 0.0
      %v754 = vadd.f32 %v752, %v753
      %v755 = vsel %vm709, %v513, 0.0
      %v756 = vadd.f32 %v754, %v755
      %v757 = vsel %vm709, %v518, 0.0
      %v758 = vadd.f32 %v756, %v757
      %v759 = vsel %vm709, %v521, 0.0
      %v760 = vadd.f32 %v758, %v759
      %v761 = vsel %vm709, %v526, 0.0
      %v762 = vadd.f32 %v760, %v761
      %v763 = vsel %vm709, %v529, 0.0
      %v764 = vadd.f32 %v762, %v763
      %v765 = vsel %vm709, %v534, 0.0
      %v766 = vadd.f32 %v764, %v765
      %v767 = vsel %vm709, %v537, 0.0
      %v768 = vadd.f32 %v766, %v767
      %v769 = vsel %vm709, %v542, 0.0
      %v770 = vadd.f32 %v768, %v769
      %v771 = vsel %vm709, %v545, 0.0
      %v772 = vadd.f32 %v770, %v771
      %v773 = vrot.slane %v772, 4
      %v774 = vadd.f32 %v772, %v773
      %v775 = vrot.slane %v774, 2
      %v776 = vadd.f32 %v774, %v775
      %v777 = vrot.slane %v776, 1
      %v778 = vadd.f32 %v776, %v777
      %v779 = vmul.f32 %v422, %v422
      %v780 = vmul.f32 %v425, %v425
      %v781 = vmul.f32 %v430, %v430
      %v782 = vmul.f32 %v433, %v433
      %v783 = vmul.f32 %v438, %v438
      %v784 = vmul.f32 %v441, %v441
      %v785 = vmul.f32 %v446, %v446
      %v786 = vmul.f32 %v449, %v449
      %v787 = vmul.f32 %v454, %v454
      %v788 = vmul.f32 %v457, %v457
      %v789 = vmul.f32 %v462, %v462
      %v790 = vmul.f32 %v465, %v465
      %v791 = vmul.f32 %v470, %v470
      %v792 = vmul.f32 %v473, %v473
      %v793 = vmul.f32 %v478, %v478
      %v794 = vmul.f32 %v481, %v481
      %v795 = vmul.f32 %v486, %v486
      %v796 = vmul.f32 %v489, %v489
      %v797 = vmul.f32 %v494, %v494
      %v798 = vmul.f32 %v497, %v497
      %v799 = vmul.f32 %v502, %v502
      %v800 = vmul.f32 %v505, %v505
      %v801 = vmul.f32 %v510, %v510
      %v802 = vmul.f32 %v513, %v513
      %v803 = vmul.f32 %v518, %v518
      %v804 = vmul.f32 %v521, %v521
      %v805 = vmul.f32 %v526, %v526
      %v806 = vmul.f32 %v529, %v529
      %v807 = vmul.f32 %v534, %v534
      %v808 = vmul.f32 %v537, %v537
      %v809 = vmul.f32 %v542, %v542
      %v810 = vmul.f32 %v545, %v545
      %v811 = vsel %vm709, %v779, 0.0
      %v812 = vsel %vm709, %v780, 0.0
      %v813 = vadd.f32 %v811, %v812
      %v814 = vsel %vm709, %v781, 0.0
      %v815 = vadd.f32 %v813, %v814
      %v816 = vsel %vm709, %v782, 0.0
      %v817 = vadd.f32 %v815, %v816
      %v818 = vsel %vm709, %v783, 0.0
      %v819 = vadd.f32 %v817, %v818
      %v820 = vsel %vm709, %v784, 0.0
      %v821 = vadd.f32 %v819, %v820
      %v822 = vsel %vm709, %v785, 0.0
      %v823 = vadd.f32 %v821, %v822
      %v824 = vsel %vm709, %v786, 0.0
      %v825 = vadd.f32 %v823, %v824
      %v826 = vsel %vm709, %v787, 0.0
      %v827 = vadd.f32 %v825, %v826
      %v828 = vsel %vm709, %v788, 0.0
      %v829 = vadd.f32 %v827, %v828
      %v830 = vsel %vm709, %v789, 0.0
      %v831 = vadd.f32 %v829, %v830
      %v832 = vsel %vm709, %v790, 0.0
      %v833 = vadd.f32 %v831, %v832
      %v834 = vsel %vm709, %v791, 0.0
      %v835 = vadd.f32 %v833, %v834
      %v836 = vsel %vm709, %v792, 0.0
      %v837 = vadd.f32 %v835, %v836
      %v838 = vsel %vm709, %v793, 0.0
      %v839 = vadd.f32 %v837, %v838
      %v840 = vsel %vm709, %v794, 0.0
      %v841 = vadd.f32 %v839, %v840
      %v842 = vsel %vm709, %v795, 0.0
      %v843 = vadd.f32 %v841, %v842
      %v844 = vsel %vm709, %v796, 0.0
      %v845 = vadd.f32 %v843, %v844
      %v846 = vsel %vm709, %v797, 0.0
      %v847 = vadd.f32 %v845, %v846
      %v848 = vsel %vm709, %v798, 0.0
      %v849 = vadd.f32 %v847, %v848
      %v850 = vsel %vm709, %v799, 0.0
      %v851 = vadd.f32 %v849, %v850
      %v852 = vsel %vm709, %v800, 0.0
      %v853 = vadd.f32 %v851, %v852
      %v854 = vsel %vm709, %v801, 0.0
      %v855 = vadd.f32 %v853, %v854
      %v856 = vsel %vm709, %v802, 0.0
      %v857 = vadd.f32 %v855, %v856
      %v858 = vsel %vm709, %v803, 0.0
      %v859 = vadd.f32 %v857, %v858
      %v860 = vsel %vm709, %v804, 0.0
      %v861 = vadd.f32 %v859, %v860
      %v862 = vsel %vm709, %v805, 0.0
      %v863 = vadd.f32 %v861, %v862
      %v864 = vsel %vm709, %v806, 0.0
      %v865 = vadd.f32 %v863, %v864
      %v866 = vsel %vm709, %v807, 0.0
      %v867 = vadd.f32 %v865, %v866
      %v868 = vsel %vm709, %v808, 0.0
      %v869 = vadd.f32 %v867, %v868
      %v870 = vsel %vm709, %v809, 0.0
      %v871 = vadd.f32 %v869, %v870
      %v872 = vsel %vm709, %v810, 0.0
      %v873 = vadd.f32 %v871, %v872
      %v874 = vrot.slane %v873, 4
      %v875 = vadd.f32 %v873, %v874
      %v876 = vrot.slane %v875, 2
      %v877 = vadd.f32 %v875, %v876
      %v878 = vrot.slane %v877, 1
      %v879 = vadd.f32 %v877, %v878
      %vm880 = vcmask 1040384
      %v881 = vsel %vm880, %v778, %v879
      %vm882 = vcmask 58368
      %883 = vst.msk [vmem:[%s184] sm:$0x3] %vm882, %v881
      %s884 = smul.u32 32, %s15
      %p885 = scmp.lt.s32.totalorder %s884, 63
      %s886 = scalar_select %p885, %s884, 63
      %s887 = smul.addr %s886, 4
      %s888 = scalar_lea.vmem %s2, %s887
      %p889 = scmp.lt.s32.totalorder %s15, 1
      %s890 = scalar_select %p889, %s15, 1
      %s891 = smul.addr %s890, 2
      %s892 = scalar_lea.vmem %s3, %s891
      // Predicated region
      $region29: #{up_block_forward.4} parent=27 // pred_check
        %p893 = pneg %p80
      $region30: #{up_block_forward.4} parent=27 // pred_check_branch
        %895 = sbr.rel (%p893) target = $region32
      $region31: #{up_block_forward.4} parent=27 // pred_region
        %s896 = smul.u32 32, %s15
      $region32: #{up_block_forward.4} parent=27 // pred_fallthru
        _
      // Predicated region
      $region33: #{up_block_forward.4} parent=27 // pred_check
        %p897 = pneg %p106
      $region34: #{up_block_forward.4} parent=27 // pred_check_branch
        %899 = sbr.rel (%p897) target = $region36
      $region35: #{up_block_forward.4} parent=27 // pred_region
        _
      $region36: #{up_block_forward.4} parent=27 // pred_fallthru
        _
    $region28: #{up_block_forward.4} parent=5 // pred_fallthru
      _
    %p900 = scmp.le.s32.totalorder 2, %s10
    // Predicated region
    $region37: #{up_block_forward.4} parent=5 // pred_check
      %p901 = pneg %p900
    $region38: #{up_block_forward.4} parent=5 // pred_check_branch
      %903 = sbr.rel (%p901) target = $region40
    $region39: #{up_block_forward.4} parent=5 // pred_region
      %s904 = ssub.s32 %s10, 2
      // Predicated region
      $region41: #{up_block_forward.4} parent=39 // pred_check
        %p905 = pneg %p86
      $region42: #{up_block_forward.4} parent=39 // pred_check_branch
        %907 = sbr.rel (%p905) target = $region44
      $region43: #{up_block_forward.4} parent=39 // pred_region
        %s908 = smul.u32 32, %s16
        %p909 = scmp.lt.s32.totalorder %s908, 63
        %s910 = scalar_select %p909, %s908, 63
        %s911 = smul.addr %s910, 4
        %s912 = scalar_lea.vmem %s2, %s911
      $region44: #{up_block_forward.4} parent=39 // pred_fallthru
        _
      // Predicated region
      $region45: #{up_block_forward.4} parent=39 // pred_check
        %p913 = pneg %p112
      $region46: #{up_block_forward.4} parent=39 // pred_check_branch
        %915 = sbr.rel (%p913) target = $region48
      $region47: #{up_block_forward.4} parent=39 // pred_region
        %p916 = scmp.lt.s32.totalorder %s16, 1
        %s917 = scalar_select %p916, %s16, 1
        %s918 = smul.addr %s917, 2
        %s919 = scalar_lea.vmem %s3, %s918
      $region48: #{up_block_forward.4} parent=39 // pred_fallthru
        _
    $region40: #{up_block_forward.4} parent=5 // pred_fallthru
      _
  $region6: #{up_block_forward.4} parent=0 // loop_footer
    %s14 = sadd.s32 1, %s10
  $region7: #{up_block_forward.4} parent=0 // loop_footer_branch
    %9 = sbr.rel target = $region3
  $region8: #{up_block_forward.4} parent=0 // loop_exit
    _

// kernel: up_block_forward.5
$region0: #{up_block_forward.5}
  #allocation0 [shape = 'u32[]', space=smem, size = 0x4, offset = 0x4, fixed_abs, tag = 'smem constant byte address 0x4 - core index']
  #allocation1 [shape = 'u32[144,128]{1,0:T(1,128)}', space=vmem, size = 0x12000, scoped, tag = 'internal scratch']
  %s0 = inlined_call_operand.vmem [shape: bf16[512,8], index: 0, kind: input, shape index: {}, may-alias: {0,3}]
  %s1 = inlined_call_operand.vmem [shape: f32[1,8], index: 1, kind: input, shape index: {}]
  %s2 = inlined_call_operand.vmem [shape: f32[1,8], index: 2, kind: input, shape index: {}]
  %s3 = inlined_call_operand.vmem [shape: bf16[512,8], index: 3, kind: output, shape index: {}, may-alias: {0,3}]
  %s4 = sld [smem:[#allocation0]]
  $region22: #{up_block_forward.5} parent=0
    _
  %s6 = ssub.s32 1, %s4
  %s7 = scalar_select 0, %s6, %s4
  // Predicated region
  $region2: #{up_block_forward.5} parent=0 // pred_check
    _
  $region3: #{up_block_forward.5} parent=0 // pred_check_branch
    %9 = sbr.rel (0) target = $region5
  $region4: #{up_block_forward.5} parent=0 // pred_region
    _
  $region5: #{up_block_forward.5} parent=0 // pred_fallthru
    _
  // Predicated region
  $region6: #{up_block_forward.5} parent=0 // pred_check
    _
  $region7: #{up_block_forward.5} parent=0 // pred_check_branch
    %11 = sbr.rel (0) target = $region9
  $region8: #{up_block_forward.5} parent=0 // pred_region
    _
  $region9: #{up_block_forward.5} parent=0 // pred_fallthru
    _
  // Predicated region
  $region10: #{up_block_forward.5} parent=0 // pred_check
    _
  $region11: #{up_block_forward.5} parent=0 // pred_check_branch
    %13 = sbr.rel (0) target = $region13
  $region12: #{up_block_forward.5} parent=0 // pred_region
    _
  $region13: #{up_block_forward.5} parent=0 // pred_fallthru
    _
  %v14 = vld [vmem:[%s0] sm:$0xf]
  %v15 = vld [vmem:[%s0 + $0x4] sm:$0xf]
  %v16 = vld [vmem:[%s0 + $0x8] sm:$0xf]
  %v17 = vld [vmem:[%s0 + $0xc] sm:$0xf]
  %v18 = vld [vmem:[%s0 + $0x10] sm:$0xf]
  %v19 = vld [vmem:[%s0 + $0x14] sm:$0xf]
  %v20 = vld [vmem:[%s0 + $0x18] sm:$0xf]
  %v21 = vld [vmem:[%s0 + $0x1c] sm:$0xf]
  %v22 = vld [vmem:[%s0 + $0x20] sm:$0xf]
  %v23 = vld [vmem:[%s0 + $0x24] sm:$0xf]
  %v24 = vld [vmem:[%s0 + $0x28] sm:$0xf]
  %v25 = vld [vmem:[%s0 + $0x2c] sm:$0xf]
  %v26 = vld [vmem:[%s0 + $0x30] sm:$0xf]
  %v27 = vld [vmem:[%s0 + $0x34] sm:$0xf]
  %v28 = vld [vmem:[%s0 + $0x38] sm:$0xf]
  %v29 = vld [vmem:[%s0 + $0x3c] sm:$0xf]
  %v30 = vld [vmem:[%s0 + $0x40] sm:$0xf]
  %v31 = vld [vmem:[%s0 + $0x44] sm:$0xf]
  %v32 = vld [vmem:[%s0 + $0x48] sm:$0xf]
  %v33 = vld [vmem:[%s0 + $0x4c] sm:$0xf]
  %v34 = vld [vmem:[%s0 + $0x50] sm:$0xf]
  %v35 = vld [vmem:[%s0 + $0x54] sm:$0xf]
  %v36 = vld [vmem:[%s0 + $0x58] sm:$0xf]
  %v37 = vld [vmem:[%s0 + $0x5c] sm:$0xf]
  %v38 = vld [vmem:[%s0 + $0x60] sm:$0xf]
  %v39 = vld [vmem:[%s0 + $0x64] sm:$0xf]
  %v40 = vld [vmem:[%s0 + $0x68] sm:$0xf]
  %v41 = vld [vmem:[%s0 + $0x6c] sm:$0xf]
  %v42 = vld [vmem:[%s0 + $0x70] sm:$0xf]
  %v43 = vld [vmem:[%s0 + $0x74] sm:$0xf]
  %v44 = vld [vmem:[%s0 + $0x78] sm:$0xf]
  %v45 = vld [vmem:[%s0 + $0x7c] sm:$0xf]
  %v46 = vld [vmem:[%s0 + $0x80] sm:$0xf]
  %v47 = vld [vmem:[%s0 + $0x84] sm:$0xf]
  %v48 = vld [vmem:[%s0 + $0x88] sm:$0xf]
  %v49 = vld [vmem:[%s0 + $0x8c] sm:$0xf]
  %v50 = vld [vmem:[%s0 + $0x90] sm:$0xf]
  %v51 = vld [vmem:[%s0 + $0x94] sm:$0xf]
  %v52 = vld [vmem:[%s0 + $0x98] sm:$0xf]
  %v53 = vld [vmem:[%s0 + $0x9c] sm:$0xf]
  %v54 = vld [vmem:[%s0 + $0xa0] sm:$0xf]
  %v55 = vld [vmem:[%s0 + $0xa4] sm:$0xf]
  %v56 = vld [vmem:[%s0 + $0xa8] sm:$0xf]
  %v57 = vld [vmem:[%s0 + $0xac] sm:$0xf]
  %v58 = vld [vmem:[%s0 + $0xb0] sm:$0xf]
  %v59 = vld [vmem:[%s0 + $0xb4] sm:$0xf]
  %v60 = vld [vmem:[%s0 + $0xb8] sm:$0xf]
  %v61 = vld [vmem:[%s0 + $0xbc] sm:$0xf]
  %v62 = vld [vmem:[%s0 + $0xc0] sm:$0xf]
  %v63 = vld [vmem:[%s0 + $0xc4] sm:$0xf]
  %v64 = vld [vmem:[%s0 + $0xc8] sm:$0xf]
  %v65 = vld [vmem:[%s0 + $0xcc] sm:$0xf]
  %v66 = vld [vmem:[%s0 + $0xd0] sm:$0xf]
  %v67 = vld [vmem:[%s0 + $0xd4] sm:$0xf]
  %v68 = vld [vmem:[%s0 + $0xd8] sm:$0xf]
  %v69 = vld [vmem:[%s0 + $0xdc] sm:$0xf]
  %v70 = vld [vmem:[%s0 + $0xe0] sm:$0xf]
  %v71 = vld [vmem:[%s0 + $0xe4] sm:$0xf]
  %v72 = vld [vmem:[%s0 + $0xe8] sm:$0xf]
  %v73 = vld [vmem:[%s0 + $0xec] sm:$0xf]
  %v74 = vld [vmem:[%s0 + $0xf0] sm:$0xf]
  %v75 = vld [vmem:[%s0 + $0xf4] sm:$0xf]
  %v76 = vld [vmem:[%s0 + $0xf8] sm:$0xf]
  %v77 = vld [vmem:[%s0 + $0xfc] sm:$0xf]
  %v78 = vunpack.c.l.bf16 %v14
  %v79 = vunpack.c.l.bf16 %v15
  %v80 = vunpack.c.l.bf16 %v16
  %v81 = vunpack.c.l.bf16 %v17
  %v82 = vunpack.c.l.bf16 %v18
  %v83 = vunpack.c.l.bf16 %v19
  %v84 = vunpack.c.l.bf16 %v20
  %v85 = vunpack.c.l.bf16 %v21
  %v86 = vunpack.c.l.bf16 %v22
  %v87 = vunpack.c.l.bf16 %v23
  %v88 = vunpack.c.l.bf16 %v24
  %v89 = vunpack.c.l.bf16 %v25
  %v90 = vunpack.c.l.bf16 %v26
  %v91 = vunpack.c.l.bf16 %v27
  %v92 = vunpack.c.l.bf16 %v28
  %v93 = vunpack.c.l.bf16 %v29
  %v94 = vunpack.c.l.bf16 %v30
  %v95 = vunpack.c.l.bf16 %v31
  %v96 = vunpack.c.l.bf16 %v32
  %v97 = vunpack.c.l.bf16 %v33
  %v98 = vunpack.c.l.bf16 %v34
  %v99 = vunpack.c.l.bf16 %v35
  %v100 = vunpack.c.l.bf16 %v36
  %v101 = vunpack.c.l.bf16 %v37
  %v102 = vunpack.c.l.bf16 %v38
  %v103 = vunpack.c.l.bf16 %v39
  %v104 = vunpack.c.l.bf16 %v40
  %v105 = vunpack.c.l.bf16 %v41
  %v106 = vunpack.c.l.bf16 %v42
  %v107 = vunpack.c.l.bf16 %v43
  %v108 = vunpack.c.l.bf16 %v44
  %v109 = vunpack.c.l.bf16 %v45
  %v110 = vunpack.c.l.bf16 %v46
  %v111 = vunpack.c.l.bf16 %v47
  %v112 = vunpack.c.l.bf16 %v48
  %v113 = vunpack.c.l.bf16 %v49
  %v114 = vunpack.c.l.bf16 %v50
  %v115 = vunpack.c.l.bf16 %v51
  %v116 = vunpack.c.l.bf16 %v52
  %v117 = vunpack.c.l.bf16 %v53
  %v118 = vunpack.c.l.bf16 %v54
  %v119 = vunpack.c.l.bf16 %v55
  %v120 = vunpack.c.l.bf16 %v56
  %v121 = vunpack.c.l.bf16 %v57
  %v122 = vunpack.c.l.bf16 %v58
  %v123 = vunpack.c.l.bf16 %v59
  %v124 = vunpack.c.l.bf16 %v60
  %v125 = vunpack.c.l.bf16 %v61
  %v126 = vunpack.c.l.bf16 %v62
  %v127 = vunpack.c.l.bf16 %v63
  %v128 = vunpack.c.l.bf16 %v64
  %v129 = vunpack.c.l.bf16 %v65
  %v130 = vunpack.c.l.bf16 %v66
  %v131 = vunpack.c.l.bf16 %v67
  %v132 = vunpack.c.l.bf16 %v68
  %v133 = vunpack.c.l.bf16 %v69
  %v134 = vunpack.c.l.bf16 %v70
  %v135 = vunpack.c.l.bf16 %v71
  %v136 = vunpack.c.l.bf16 %v72
  %v137 = vunpack.c.l.bf16 %v73
  %v138 = vunpack.c.l.bf16 %v74
  %v139 = vunpack.c.l.bf16 %v75
  %v140 = vunpack.c.l.bf16 %v76
  %v141 = vunpack.c.l.bf16 %v77
  %v142 = vld [vmem:[%s1] sm:$0x1]
  %v144 = vlaneseq
  %v145 = vshrl.u32 %v144, 7
  %v146 = vsub.s32 0, %v145
  %v147 = vrot.slane %v142, %v146
  %v149 = vmul.f32 %v78, %v147
  %v150 = vmul.f32 %v79, %v147
  %v151 = vmul.f32 %v80, %v147
  %v152 = vmul.f32 %v81, %v147
  %v153 = vmul.f32 %v82, %v147
  %v154 = vmul.f32 %v83, %v147
  %v155 = vmul.f32 %v84, %v147
  %v156 = vmul.f32 %v85, %v147
  %v157 = vmul.f32 %v86, %v147
  %v158 = vmul.f32 %v87, %v147
  %v159 = vmul.f32 %v88, %v147
  %v160 = vmul.f32 %v89, %v147
  %v161 = vmul.f32 %v90, %v147
  %v162 = vmul.f32 %v91, %v147
  %v163 = vmul.f32 %v92, %v147
  %v164 = vmul.f32 %v93, %v147
  %v165 = vmul.f32 %v94, %v147
  %v166 = vmul.f32 %v95, %v147
  %v167 = vmul.f32 %v96, %v147
  %v168 = vmul.f32 %v97, %v147
  %v169 = vmul.f32 %v98, %v147
  %v170 = vmul.f32 %v99, %v147
  %v171 = vmul.f32 %v100, %v147
  %v172 = vmul.f32 %v101, %v147
  %v173 = vmul.f32 %v102, %v147
  %v174 = vmul.f32 %v103, %v147
  %v175 = vmul.f32 %v104, %v147
  %v176 = vmul.f32 %v105, %v147
  %v177 = vmul.f32 %v106, %v147
  %v178 = vmul.f32 %v107, %v147
  %v179 = vmul.f32 %v108, %v147
  %v180 = vmul.f32 %v109, %v147
  %v181 = vmul.f32 %v110, %v147
  %v182 = vmul.f32 %v111, %v147
  %v183 = vmul.f32 %v112, %v147
  %v184 = vmul.f32 %v113, %v147
  %v185 = vmul.f32 %v114, %v147
  %v186 = vmul.f32 %v115, %v147
  %v187 = vmul.f32 %v116, %v147
  %v188 = vmul.f32 %v117, %v147
  %v189 = vmul.f32 %v118, %v147
  %v190 = vmul.f32 %v119, %v147
  %v191 = vmul.f32 %v120, %v147
  %v192 = vmul.f32 %v121, %v147
  %v193 = vmul.f32 %v122, %v147
  %v194 = vmul.f32 %v123, %v147
  %v195 = vmul.f32 %v124, %v147
  %v196 = vmul.f32 %v125, %v147
  %v197 = vmul.f32 %v126, %v147
  %v198 = vmul.f32 %v127, %v147
  %v199 = vmul.f32 %v128, %v147
  %v200 = vmul.f32 %v129, %v147
  %v201 = vmul.f32 %v130, %v147
  %v202 = vmul.f32 %v131, %v147
  %v203 = vmul.f32 %v132, %v147
  %v204 = vmul.f32 %v133, %v147
  %v205 = vmul.f32 %v134, %v147
  %v206 = vmul.f32 %v135, %v147
  %v207 = vmul.f32 %v136, %v147
  %v208 = vmul.f32 %v137, %v147
  %v209 = vmul.f32 %v138, %v147
  %v210 = vmul.f32 %v139, %v147
  %v211 = vmul.f32 %v140, %v147
  %v212 = vmul.f32 %v141, %v147
  %v213 = vld [vmem:[%s2] sm:$0x1]
  %v215 = vlaneseq
  %v216 = vshrl.u32 %v215, 7
  %v217 = vsub.s32 0, %v216
  %v218 = vrot.slane %v213, %v217
  %v220 = vadd.f32 %v149, %v218
  %v221 = vadd.f32 %v150, %v218
  %v222 = vadd.f32 %v151, %v218
  %v223 = vadd.f32 %v152, %v218
  %v224 = vadd.f32 %v153, %v218
  %v225 = vadd.f32 %v154, %v218
  %v226 = vadd.f32 %v155, %v218
  %v227 = vadd.f32 %v156, %v218
  %v228 = vadd.f32 %v157, %v218
  %v229 = vadd.f32 %v158, %v218
  %v230 = vadd.f32 %v159, %v218
  %v231 = vadd.f32 %v160, %v218
  %v232 = vadd.f32 %v161, %v218
  %v233 = vadd.f32 %v162, %v218
  %v234 = vadd.f32 %v163, %v218
  %v235 = vadd.f32 %v164, %v218
  %v236 = vadd.f32 %v165, %v218
  %v237 = vadd.f32 %v166, %v218
  %v238 = vadd.f32 %v167, %v218
  %v239 = vadd.f32 %v168, %v218
  %v240 = vadd.f32 %v169, %v218
  %v241 = vadd.f32 %v170, %v218
  %v242 = vadd.f32 %v171, %v218
  %v243 = vadd.f32 %v172, %v218
  %v244 = vadd.f32 %v173, %v218
  %v245 = vadd.f32 %v174, %v218
  %v246 = vadd.f32 %v175, %v218
  %v247 = vadd.f32 %v176, %v218
  %v248 = vadd.f32 %v177, %v218
  %v249 = vadd.f32 %v178, %v218
  %v250 = vadd.f32 %v179, %v218
  %v251 = vadd.f32 %v180, %v218
  %v252 = vadd.f32 %v181, %v218
  %v253 = vadd.f32 %v182, %v218
  %v254 = vadd.f32 %v183, %v218
  %v255 = vadd.f32 %v184, %v218
  %v256 = vadd.f32 %v185, %v218
  %v257 = vadd.f32 %v186, %v218
  %v258 = vadd.f32 %v187, %v218
  %v259 = vadd.f32 %v188, %v218
  %v260 = vadd.f32 %v189, %v218
  %v261 = vadd.f32 %v190, %v218
  %v262 = vadd.f32 %v191, %v218
  %v263 = vadd.f32 %v192, %v218
  %v264 = vadd.f32 %v193, %v218
  %v265 = vadd.f32 %v194, %v218
  %v266 = vadd.f32 %v195, %v218
  %v267 = vadd.f32 %v196, %v218
  %v268 = vadd.f32 %v197, %v218
  %v269 = vadd.f32 %v198, %v218
  %v270 = vadd.f32 %v199, %v218
  %v271 = vadd.f32 %v200, %v218
  %v272 = vadd.f32 %v201, %v218
  %v273 = vadd.f32 %v202, %v218
  %v274 = vadd.f32 %v203, %v218
  %v275 = vadd.f32 %v204, %v218
  %v276 = vadd.f32 %v205, %v218
  %v277 = vadd.f32 %v206, %v218
  %v278 = vadd.f32 %v207, %v218
  %v279 = vadd.f32 %v208, %v218
  %v280 = vadd.f32 %v209, %v218
  %v281 = vadd.f32 %v210, %v218
  %v282 = vadd.f32 %v211, %v218
  %v283 = vadd.f32 %v212, %v218
  %v284 = vmax.f32 %v220, 0.0
  %v285 = vmax.f32 %v221, 0.0
  %v286 = vmax.f32 %v222, 0.0
  %v287 = vmax.f32 %v223, 0.0
  %v288 = vmax.f32 %v224, 0.0
  %v289 = vmax.f32 %v225, 0.0
  %v290 = vmax.f32 %v226, 0.0
  %v291 = vmax.f32 %v227, 0.0
  %v292 = vmax.f32 %v228, 0.0
  %v293 = vmax.f32 %v229, 0.0
  %v294 = vmax.f32 %v230, 0.0
  %v295 = vmax.f32 %v231, 0.0
  %v296 = vmax.f32 %v232, 0.0
  %v297 = vmax.f32 %v233, 0.0
  %v298 = vmax.f32 %v234, 0.0
  %v299 = vmax.f32 %v235, 0.0
  %v300 = vmax.f32 %v236, 0.0
  %v301 = vmax.f32 %v237, 0.0
  %v302 = vmax.f32 %v238, 0.0
  %v303 = vmax.f32 %v239, 0.0
  %v304 = vmax.f32 %v240, 0.0
  %v305 = vmax.f32 %v241, 0.0
  %v306 = vmax.f32 %v242, 0.0
  %v307 = vmax.f32 %v243, 0.0
  %v308 = vmax.f32 %v244, 0.0
  %v309 = vmax.f32 %v245, 0.0
  %v310 = vmax.f32 %v246, 0.0
  %v311 = vmax.f32 %v247, 0.0
  %v312 = vmax.f32 %v248, 0.0
  %v313 = vmax.f32 %v249, 0.0
  %v314 = vmax.f32 %v250, 0.0
  %v315 = vmax.f32 %v251, 0.0
  %v316 = vmax.f32 %v252, 0.0
  %v317 = vmax.f32 %v253, 0.0
  %v318 = vmax.f32 %v254, 0.0
  %v319 = vmax.f32 %v255, 0.0
  %v320 = vmax.f32 %v256, 0.0
  %v321 = vmax.f32 %v257, 0.0
  %v322 = vmax.f32 %v258, 0.0
  %v323 = vmax.f32 %v259, 0.0
  %v324 = vmax.f32 %v260, 0.0
  %v325 = vmax.f32 %v261, 0.0
  %v326 = vmax.f32 %v262, 0.0
  %v327 = vmax.f32 %v263, 0.0
  %v328 = vmax.f32 %v264, 0.0
  %v329 = vmax.f32 %v265, 0.0
  %v330 = vmax.f32 %v266, 0.0
  %v331 = vmax.f32 %v267, 0.0
  %v332 = vmax.f32 %v268, 0.0
  %v333 = vmax.f32 %v269, 0.0
  %v334 = vmax.f32 %v270, 0.0
  %v335 = vmax.f32 %v271, 0.0
  %v336 = vmax.f32 %v272, 0.0
  %v337 = vmax.f32 %v273, 0.0
  %v338 = vmax.f32 %v274, 0.0
  %v339 = vmax.f32 %v275, 0.0
  %v340 = vmax.f32 %v276, 0.0
  %v341 = vmax.f32 %v277, 0.0
  %v342 = vmax.f32 %v278, 0.0
  %v343 = vmax.f32 %v279, 0.0
  %v344 = vmax.f32 %v280, 0.0
  %v345 = vmax.f32 %v281, 0.0
  %v346 = vmax.f32 %v282, 0.0
  %v347 = vmax.f32 %v283, 0.0
  %v348 = vpack.c.bf16 %v285, %v284
  %v349 = vpack.c.bf16 %v287, %v286
  %v350 = vpack.c.bf16 %v289, %v288
  %v351 = vpack.c.bf16 %v291, %v290
  %v352 = vpack.c.bf16 %v293, %v292
  %v353 = vpack.c.bf16 %v295, %v294
  %v354 = vpack.c.bf16 %v297, %v296
  %v355 = vpack.c.bf16 %v299, %v298
  %v356 = vpack.c.bf16 %v301, %v300
  %v357 = vpack.c.bf16 %v303, %v302
  %v358 = vpack.c.bf16 %v305, %v304
  %v359 = vpack.c.bf16 %v307, %v306
  %v360 = vpack.c.bf16 %v309, %v308
  %v361 = vpack.c.bf16 %v311, %v310
  %v362 = vpack.c.bf16 %v313, %v312
  %v363 = vpack.c.bf16 %v315, %v314
  %v364 = vpack.c.bf16 %v317, %v316
  %v365 = vpack.c.bf16 %v319, %v318
  %v366 = vpack.c.bf16 %v321, %v320
  %v367 = vpack.c.bf16 %v323, %v322
  %v368 = vpack.c.bf16 %v325, %v324
  %v369 = vpack.c.bf16 %v327, %v326
  %v370 = vpack.c.bf16 %v329, %v328
  %v371 = vpack.c.bf16 %v331, %v330
  %v372 = vpack.c.bf16 %v333, %v332
  %v373 = vpack.c.bf16 %v335, %v334
  %v374 = vpack.c.bf16 %v337, %v336
  %v375 = vpack.c.bf16 %v339, %v338
  %v376 = vpack.c.bf16 %v341, %v340
  %v377 = vpack.c.bf16 %v343, %v342
  %v378 = vpack.c.bf16 %v345, %v344
  %v379 = vpack.c.bf16 %v347, %v346
  %v412 = vunpack.c.l.b16 %v348
  %v413 = vunpack.c.h.b16 %v348
  %v414 = vunpack.c.l.b16 %v349
  %v415 = vunpack.c.h.b16 %v349
  %v416 = vunpack.c.l.b16 %v350
  %v417 = vunpack.c.h.b16 %v350
  %v418 = vunpack.c.l.b16 %v351
  %v419 = vunpack.c.h.b16 %v351
  %v420 = vunpack.c.l.b16 %v352
  %v421 = vunpack.c.h.b16 %v352
  %v422 = vunpack.c.l.b16 %v353
  %v423 = vunpack.c.h.b16 %v353
  %v424 = vunpack.c.l.b16 %v354
  %v425 = vunpack.c.h.b16 %v354
  %v426 = vunpack.c.l.b16 %v355
  %v427 = vunpack.c.h.b16 %v355
  %v428 = vunpack.c.l.b16 %v356
  %v429 = vunpack.c.h.b16 %v356
  %v430 = vunpack.c.l.b16 %v357
  %v431 = vunpack.c.h.b16 %v357
  %v432 = vunpack.c.l.b16 %v358
  %v433 = vunpack.c.h.b16 %v358
  %v434 = vunpack.c.l.b16 %v359
  %v435 = vunpack.c.h.b16 %v359
  %v436 = vunpack.c.l.b16 %v360
  %v437 = vunpack.c.h.b16 %v360
  %v438 = vunpack.c.l.b16 %v361
  %v439 = vunpack.c.h.b16 %v361
  %v440 = vunpack.c.l.b16 %v362
  %v441 = vunpack.c.h.b16 %v362
  %v442 = vunpack.c.l.b16 %v363
  %v443 = vunpack.c.h.b16 %v363
  %v444 = vunpack.c.l.b16 %v364
  %v445 = vunpack.c.h.b16 %v364
  %v446 = vunpack.c.l.b16 %v365
  %v447 = vunpack.c.h.b16 %v365
  %v448 = vunpack.c.l.b16 %v366
  %v449 = vunpack.c.h.b16 %v366
  %v450 = vunpack.c.l.b16 %v367
  %v451 = vunpack.c.h.b16 %v367
  %v452 = vunpack.c.l.b16 %v368
  %v453 = vunpack.c.h.b16 %v368
  %v454 = vunpack.c.l.b16 %v369
  %v455 = vunpack.c.h.b16 %v369
  %v456 = vunpack.c.l.b16 %v370
  %v457 = vunpack.c.h.b16 %v370
  %v458 = vunpack.c.l.b16 %v371
  %v459 = vunpack.c.h.b16 %v371
  %v460 = vunpack.c.l.b16 %v372
  %v461 = vunpack.c.h.b16 %v372
  %v462 = vunpack.c.l.b16 %v373
  %v463 = vunpack.c.h.b16 %v373
  %v464 = vunpack.c.l.b16 %v374
  %v465 = vunpack.c.h.b16 %v374
  %v466 = vunpack.c.l.b16 %v375
  %v467 = vunpack.c.h.b16 %v375
  %v468 = vunpack.c.l.b16 %v376
  %v469 = vunpack.c.h.b16 %v376
  %v470 = vunpack.c.l.b16 %v377
  %v471 = vunpack.c.h.b16 %v377
  %v472 = vunpack.c.l.b16 %v378
  %v473 = vunpack.c.h.b16 %v378
  %v474 = vunpack.c.l.b16 %v379
  %v475 = vunpack.c.h.b16 %v379
  %v476 = vpack.c.b16 %v412, %v412
  %v477 = vpack.c.b16 %v413, %v413
  %v478 = vpack.c.b16 %v414, %v414
  %v479 = vpack.c.b16 %v415, %v415
  %v480 = vpack.c.b16 %v416, %v416
  %v481 = vpack.c.b16 %v417, %v417
  %v482 = vpack.c.b16 %v418, %v418
  %v483 = vpack.c.b16 %v419, %v419
  %v484 = vpack.c.b16 %v420, %v420
  %v485 = vpack.c.b16 %v421, %v421
  %v486 = vpack.c.b16 %v422, %v422
  %v487 = vpack.c.b16 %v423, %v423
  %v488 = vpack.c.b16 %v424, %v424
  %v489 = vpack.c.b16 %v425, %v425
  %v490 = vpack.c.b16 %v426, %v426
  %v491 = vpack.c.b16 %v427, %v427
  %v492 = vpack.c.b16 %v428, %v428
  %v493 = vpack.c.b16 %v429, %v429
  %v494 = vpack.c.b16 %v430, %v430
  %v495 = vpack.c.b16 %v431, %v431
  %v496 = vpack.c.b16 %v432, %v432
  %v497 = vpack.c.b16 %v433, %v433
  %v498 = vpack.c.b16 %v434, %v434
  %v499 = vpack.c.b16 %v435, %v435
  %v500 = vpack.c.b16 %v436, %v436
  %v501 = vpack.c.b16 %v437, %v437
  %v502 = vpack.c.b16 %v438, %v438
  %v503 = vpack.c.b16 %v439, %v439
  %v504 = vpack.c.b16 %v440, %v440
  %v505 = vpack.c.b16 %v441, %v441
  %v506 = vpack.c.b16 %v442, %v442
  %v507 = vpack.c.b16 %v443, %v443
  %v508 = vpack.c.b16 %v444, %v444
  %v509 = vpack.c.b16 %v445, %v445
  %v510 = vpack.c.b16 %v446, %v446
  %v511 = vpack.c.b16 %v447, %v447
  %v512 = vpack.c.b16 %v448, %v448
  %v513 = vpack.c.b16 %v449, %v449
  %v514 = vpack.c.b16 %v450, %v450
  %v515 = vpack.c.b16 %v451, %v451
  %v516 = vpack.c.b16 %v452, %v452
  %v517 = vpack.c.b16 %v453, %v453
  %v518 = vpack.c.b16 %v454, %v454
  %v519 = vpack.c.b16 %v455, %v455
  %v520 = vpack.c.b16 %v456, %v456
  %v521 = vpack.c.b16 %v457, %v457
  %v522 = vpack.c.b16 %v458, %v458
  %v523 = vpack.c.b16 %v459, %v459
  %v524 = vpack.c.b16 %v460, %v460
  %v525 = vpack.c.b16 %v461, %v461
  %v526 = vpack.c.b16 %v462, %v462
  %v527 = vpack.c.b16 %v463, %v463
  %v528 = vpack.c.b16 %v464, %v464
  %v529 = vpack.c.b16 %v465, %v465
  %v530 = vpack.c.b16 %v466, %v466
  %v531 = vpack.c.b16 %v467, %v467
  %v532 = vpack.c.b16 %v468, %v468
  %v533 = vpack.c.b16 %v469, %v469
  %v534 = vpack.c.b16 %v470, %v470
  %v535 = vpack.c.b16 %v471, %v471
  %v536 = vpack.c.b16 %v472, %v472
  %v537 = vpack.c.b16 %v473, %v473
  %v538 = vpack.c.b16 %v474, %v474
  %v539 = vpack.c.b16 %v475, %v475
  %vm604 = vcmask 60416
  %605 = vst.msk [vmem:[%s3] sm:$0xf] %vm604, %v476
  %606 = vst.msk [vmem:[%s3 + $0x4] sm:$0xf] %vm604, %v477
  %607 = vst.msk [vmem:[%s3 + $0x8] sm:$0xf] %vm604, %v478
  %608 = vst.msk [vmem:[%s3 + $0xc] sm:$0xf] %vm604, %v479
  %609 = vst.msk [vmem:[%s3 + $0x10] sm:$0xf] %vm604, %v480
  %610 = vst.msk [vmem:[%s3 + $0x14] sm:$0xf] %vm604, %v481
  %611 = vst.msk [vmem:[%s3 + $0x18] sm:$0xf] %vm604, %v482
  %612 = vst.msk [vmem:[%s3 + $0x1c] sm:$0xf] %vm604, %v483
  %613 = vst.msk [vmem:[%s3 + $0x20] sm:$0xf] %vm604, %v484
  %614 = vst.msk [vmem:[%s3 + $0x24] sm:$0xf] %vm604, %v485
  %615 = vst.msk [vmem:[%s3 + $0x28] sm:$0xf] %vm604, %v486
  %616 = vst.msk [vmem:[%s3 + $0x2c] sm:$0xf] %vm604, %v487
  %617 = vst.msk [vmem:[%s3 + $0x30] sm:$0xf] %vm604, %v488
  %618 = vst.msk [vmem:[%s3 + $0x34] sm:$0xf] %vm604, %v489
  %619 = vst.msk [vmem:[%s3 + $0x38] sm:$0xf] %vm604, %v490
  %620 = vst.msk [vmem:[%s3 + $0x3c] sm:$0xf] %vm604, %v491
  %621 = vst.msk [vmem:[%s3 + $0x40] sm:$0xf] %vm604, %v492
  %622 = vst.msk [vmem:[%s3 + $0x44] sm:$0xf] %vm604, %v493
  %623 = vst.msk [vmem:[%s3 + $0x48] sm:$0xf] %vm604, %v494
  %624 = vst.msk [vmem:[%s3 + $0x4c] sm:$0xf] %vm604, %v495
  %625 = vst.msk [vmem:[%s3 + $0x50] sm:$0xf] %vm604, %v496
  %626 = vst.msk [vmem:[%s3 + $0x54] sm:$0xf] %vm604, %v497
  %627 = vst.msk [vmem:[%s3 + $0x58] sm:$0xf] %vm604, %v498
  %628 = vst.msk [vmem:[%s3 + $0x5c] sm:$0xf] %vm604, %v499
  %629 = vst.msk [vmem:[%s3 + $0x60] sm:$0xf] %vm604, %v500
  %630 = vst.msk [vmem:[%s3 + $0x64] sm:$0xf] %vm604, %v501
  %631 = vst.msk [vmem:[%s3 + $0x68] sm:$0xf] %vm604, %v502
  %632 = vst.msk [vmem:[%s3 + $0x6c] sm:$0xf] %vm604, %v503
  %633 = vst.msk [vmem:[%s3 + $0x70] sm:$0xf] %vm604, %v504
  %634 = vst.msk [vmem:[%s3 + $0x74] sm:$0xf] %vm604, %v505
  %635 = vst.msk [vmem:[%s3 + $0x78] sm:$0xf] %vm604, %v506
  %636 = vst.msk [vmem:[%s3 + $0x7c] sm:$0xf] %vm604, %v507
  %637 = vst.msk [vmem:[%s3 + $0x80] sm:$0xf] %vm604, %v508
  %638 = vst.msk [vmem:[%s3 + $0x84] sm:$0xf] %vm604, %v509
  %639 = vst.msk [vmem:[%s3 + $0x88] sm:$0xf] %vm604, %v510
  %640 = vst.msk [vmem:[%s3 + $0x8c] sm:$0xf] %vm604, %v511
  %641 = vst.msk [vmem:[%s3 + $0x90] sm:$0xf] %vm604, %v512
  %642 = vst.msk [vmem:[%s3 + $0x94] sm:$0xf] %vm604, %v513
  %643 = vst.msk [vmem:[%s3 + $0x98] sm:$0xf] %vm604, %v514
  %644 = vst.msk [vmem:[%s3 + $0x9c] sm:$0xf] %vm604, %v515
  %645 = vst.msk [vmem:[%s3 + $0xa0] sm:$0xf] %vm604, %v516
  %646 = vst.msk [vmem:[%s3 + $0xa4] sm:$0xf] %vm604, %v517
  %647 = vst.msk [vmem:[%s3 + $0xa8] sm:$0xf] %vm604, %v518
  %648 = vst.msk [vmem:[%s3 + $0xac] sm:$0xf] %vm604, %v519
  %649 = vst.msk [vmem:[%s3 + $0xb0] sm:$0xf] %vm604, %v520
  %650 = vst.msk [vmem:[%s3 + $0xb4] sm:$0xf] %vm604, %v521
  %651 = vst.msk [vmem:[%s3 + $0xb8] sm:$0xf] %vm604, %v522
  %652 = vst.msk [vmem:[%s3 + $0xbc] sm:$0xf] %vm604, %v523
  %653 = vst.msk [vmem:[%s3 + $0xc0] sm:$0xf] %vm604, %v524
  %654 = vst.msk [vmem:[%s3 + $0xc4] sm:$0xf] %vm604, %v525
  %655 = vst.msk [vmem:[%s3 + $0xc8] sm:$0xf] %vm604, %v526
  %656 = vst.msk [vmem:[%s3 + $0xcc] sm:$0xf] %vm604, %v527
  %657 = vst.msk [vmem:[%s3 + $0xd0] sm:$0xf] %vm604, %v528
  %658 = vst.msk [vmem:[%s3 + $0xd4] sm:$0xf] %vm604, %v529
  %659 = vst.msk [vmem:[%s3 + $0xd8] sm:$0xf] %vm604, %v530
  %660 = vst.msk [vmem:[%s3 + $0xdc] sm:$0xf] %vm604, %v531
  %661 = vst.msk [vmem:[%s3 + $0xe0] sm:$0xf] %vm604, %v532
  %662 = vst.msk [vmem:[%s3 + $0xe4] sm:$0xf] %vm604, %v533
  %663 = vst.msk [vmem:[%s3 + $0xe8] sm:$0xf] %vm604, %v534
  %664 = vst.msk [vmem:[%s3 + $0xec] sm:$0xf] %vm604, %v535
  %665 = vst.msk [vmem:[%s3 + $0xf0] sm:$0xf] %vm604, %v536
  %666 = vst.msk [vmem:[%s3 + $0xf4] sm:$0xf] %vm604, %v537
  %667 = vst.msk [vmem:[%s3 + $0xf8] sm:$0xf] %vm604, %v538
  %668 = vst.msk [vmem:[%s3 + $0xfc] sm:$0xf] %vm604, %v539
  // Predicated region
  $region14: #{up_block_forward.5} parent=0 // pred_check
    _
  $region15: #{up_block_forward.5} parent=0 // pred_check_branch
    %670 = sbr.rel (0) target = $region17
  $region16: #{up_block_forward.5} parent=0 // pred_region
    _
  $region17: #{up_block_forward.5} parent=0 // pred_fallthru
    _
  // Predicated region
  $region18: #{up_block_forward.5} parent=0 // pred_check
    _
  $region19: #{up_block_forward.5} parent=0 // pred_check_branch
    %672 = sbr.rel (0) target = $region21
  $region20: #{up_block_forward.5} parent=0 // pred_region
    _
  $region21: #{up_block_forward.5} parent=0 // pred_fallthru
    _

</llo_original>
